<compile_context>
chip_gen: v7x
topology: tpu7x:2x2x1
jax: 0.10.0
libtpu: 0.0.40
codegen_flags: <defaults>
</compile_context>

<pallas_src>
import functools

import jax
import jax.numpy as jnp
import numpy as np
from jax.experimental import pallas as pl
from jax.experimental.pallas import tpu as pltpu

EPS = 1e-5


def _batchnorm(acc, gamma, beta):
    """Training-mode BatchNorm on a (CP, M) f32 activation (biased variance)."""
    mean = jnp.mean(acc, axis=1, keepdims=True)
    var = jnp.mean((acc - mean) ** 2, axis=1, keepdims=True)
    return (acc - mean) * jax.lax.rsqrt(var + EPS) * gamma + beta


def _fill_im2col(col_ref, padflat, tap_masks, *, W, CP, M, lane_pad):
    """Build the 3x3 im2col matrix (9*CP, M) in a bf16 VMEM scratch.

    padflat : (CP, lane_pad + M + lane_pad) f32 value; the interior
              [lane_pad : lane_pad + M) holds the activation in flat
              (n, h, w) order, channels (zero-padded to CP) on the sublane
              axis, M on lanes.  Halo strips may be uninitialized — every tap
              that could read them is masked out with a select below.
    tap_masks : list of 9 (1, M) bool predicates (None for the center tap),
              shared between both convs.

    Row block t = kh*3 + kw of col_ref holds input[c, h+kh-1, w+kw-1]
    (zero outside the image), matching the (kh, kw, cin) column order of the
    repacked conv weights.  CP is a multiple of 16, so every store below is a
    full, tile-aligned bf16 sublane block.
    """
    for kh in range(3):
        for kw in range(3):
            t = kh * 3 + kw
            shift = (kh - 1) * W + (kw - 1)
            # Static lane-offset slice of the flat-padded value (the halo is
            # >= W+1 wide, so every slice stays in bounds).
            tap = padflat[:, lane_pad + shift: lane_pad + shift + M]
            mask = tap_masks[t]
            if mask is not None:
                # Select (not multiply) so uninitialized halo values can never
                # contaminate the result.
                tap = jnp.where(mask, tap, 0.0)
            col_ref[t * CP:(t + 1) * CP, :] = tap.astype(jnp.bfloat16)


def resblock_kernel(x_ref, hpos_ref, wpos_ref, w1_ref, g1_ref, b1_ref,
                    w2_ref, g2_ref, b2_ref, out_ref, xpf_ref, ypf_ref,
                    col_ref, *, H, W, lane_pad):
    # x_ref   : (CP, M) f32          channel-padded flat input (channels x (n,h,w))
    # hpos/wpos: (1, M) i32          per-column h / w coordinates
    # w1_ref  : (CP, 9*CP) bf16      conv1 weights, rows = c_out, cols = (tap, c_in)
    # w2_ref  : (CP, 9*CP) bf16
    # g*/b*   : (CP, 1) f32          BatchNorm gamma / beta (padded rows: 1 / 0)
    # out_ref : (CP, M) f32          lane-dense, sublane-aligned output
    # xpf_ref : (CP, LP + M + LP) f32  scratch: flat-padded input (halo uninit)
    # ypf_ref : (CP, LP + M + LP) f32  scratch: flat-padded intermediate
    # col_ref : (9*CP, M) bf16       scratch: shared im2col buffer
    CP, M = out_ref.shape

    # ---- boundary masks: computed once, shared by both convs ----
    hpos = hpos_ref[...]
    wpos = wpos_ref[...]
    h_lo, h_hi = hpos >= 1, hpos < H - 1
    w_lo, w_hi = wpos >= 1, wpos < W - 1
    tap_masks = []
    for kh in range(3):
        for kw in range(3):
            dh, dw = kh - 1, kw - 1
            conds = []
            if dh < 0:
                conds.append(h_lo)
            if dh > 0:
                conds.append(h_hi)
            if dw < 0:
                conds.append(w_lo)
            if dw > 0:
                conds.append(w_hi)
            tap_masks.append(
                functools.reduce(jnp.logical_and, conds) if conds else None)

    # ---- pad the input in VMEM: write the (lane-aligned) interior only ----
    x = x_ref[...]                                   # (CP, M) f32
    xpf_ref[:, lane_pad:lane_pad + M] = x            # halos never read unmasked

    # ---- conv1: ONE (CP, 9CP) x (9CP, M) bf16 MXU matmul via im2col ----
    _fill_im2col(col_ref, xpf_ref[...], tap_masks, W=W, CP=CP, M=M,
                 lane_pad=lane_pad)
    acc1 = jnp.dot(w1_ref[...], col_ref[...],
                   preferred_element_type=jnp.float32)            # (CP, M) f32

    # ---- BatchNorm1 (batch stats, biased var) + ReLU, all in f32 ----
    y = jnp.maximum(_batchnorm(acc1, g1_ref[...], b1_ref[...]), 0.0)

    # ---- stash the intermediate: interior write only, no halo zero-fill ----
    ypf_ref[:, lane_pad:lane_pad + M] = y

    # ---- conv2: ONE bf16 MXU matmul via im2col (scratch + masks reused) ----
    _fill_im2col(col_ref, ypf_ref[...], tap_masks, W=W, CP=CP, M=M,
                 lane_pad=lane_pad)
    acc2 = jnp.dot(w2_ref[...], col_ref[...],
                   preferred_element_type=jnp.float32)            # (CP, M) f32

    # ---- BatchNorm2 + identity residual + final ReLU ----
    z = _batchnorm(acc2, g2_ref[...], b2_ref[...])
    out_ref[...] = jnp.maximum(z + x, 0.0)   # lane-dense, unmasked (CP, M) store


@jax.jit
def residual_block_forward(x_nchw, w1, g1, b1, w2, g2, b2):
    """x_nchw: (N, Cin, H, W) f32.  Returns (N, C, H, W) f32."""
    N, Cin, H, W = x_nchw.shape
    C = w1.shape[-1]
    # Identity shortcut (shortcut=None in the PyTorch module) needs matching
    # channels and stride 1.
    assert Cin == C, "identity residual requires in_channel == out_channel"
    # TODO(synk): projection shortcut branch (1x1 Conv2d + BN when shortcut is
    # given) is not implemented; the module under test uses shortcut=None.

    M = N * H * W
    assert M % 128 == 0, "flattened spatial size must be lane-aligned"
    # TODO(synk): non-128-multiple M would need lane padding excluded from the
    # BatchNorm statistics; not needed for the shapes under test.

    # Channel pad to the bf16 sublane tile (16) so every im2col tap block,
    # every elementwise op, and the output store are vreg-tile aligned.
    CP = max(16, ((C + 15) // 16) * 16)
    # Halo on the flattened spatial axis: >= W+1 and 128-aligned so the
    # interior store/slice offsets are lane-tile aligned.
    LP = ((W + 1 + 127) // 128) * 128

    # ---------------- layout plumbing (pure data movement, XLA) -------------
    x_flat = jnp.transpose(x_nchw, (1, 0, 2, 3)).reshape(C, M)      # (C, M)
    x_cp = jnp.pad(x_flat, ((0, CP - C), (0, 0)))                   # (CP, M)

    m = jnp.arange(M, dtype=jnp.int32)
    wpos = (m % W).reshape(1, M)
    hpos = ((m // W) % H).reshape(1, M)

    def repack(w):
        # HWIO -> (C_out, kh, kw, C_in), zero-pad both channel axes to CP,
        # then flatten so column index = (kh*3+kw)*CP + c_in matches the
        # im2col row order.  Padded rows/columns are exactly zero.
        wt = jnp.transpose(w, (3, 0, 1, 2))
        wt = jnp.pad(wt, ((0, CP - C), (0, 0), (0, 0), (0, CP - Cin)))
        return wt.reshape(CP, 9 * CP).astype(jnp.bfloat16)

    w1r, w2r = repack(w1), repack(w2)
    g1c = jnp.pad(g1, (0, CP - C), constant_values=1.0).reshape(CP, 1)
    b1c = jnp.pad(b1, (0, CP - C)).reshape(CP, 1)
    g2c = jnp.pad(g2, (0, CP - C), constant_values=1.0).reshape(CP, 1)
    b2c = jnp.pad(b2, (0, CP - C)).reshape(CP, 1)

    # NOTE: at this toy size everything (a few hundred KB) fits easily in
    # VMEM, so a single gridless program is used.  For realistic ResNet
    # shapes this would become a batch/row-tiled grid with a 1-row halo,
    # split sum / sum-of-squares BatchNorm finalized under pl.when (reduction
    # axis last, "arbitrary"), dimension_semantics=("parallel", ...) for the
    # two v7x TensorCores, and an M-tile sized for 64 MiB VMEM (v7x) vs
    # 128 MiB (v6e) with the bf16 im2col buffer (9x the activation tile) as
    # the sizing constraint.
    kernel = functools.partial(resblock_kernel, H=H, W=W, lane_pad=LP)
    out_cp = pl.pallas_call(
        kernel,
        out_shape=jax.ShapeDtypeStruct((CP, M), jnp.float32),
        in_specs=[pl.BlockSpec(memory_space=pltpu.MemorySpace.VMEM)] * 9,
        out_specs=pl.BlockSpec(memory_space=pltpu.MemorySpace.VMEM),
        scratch_shapes=[
            pltpu.VMEM((CP, LP + M + LP), jnp.float32),   # flat-padded x
            pltpu.VMEM((CP, LP + M + LP), jnp.float32),   # flat-padded y
            pltpu.VMEM((9 * CP, M), jnp.bfloat16),        # shared im2col buffer
        ],
        compiler_params=pltpu.CompilerParams(
            vmem_limit_bytes=32 * 1024 * 1024),
    )(x_cp, hpos, wpos, w1r, g1c, b1c, w2r, g2c, b2c)

    out_flat = out_cp[:C]                                 # drop padded rows
    return jnp.transpose(out_flat.reshape(C, N, H, W), (1, 0, 2, 3))


def reference_forward(x_nchw, w1, g1, b1, w2, g2, b2):
    """Pure-JAX f32 reference (same training-mode BN semantics)."""
    x = jnp.transpose(x_nchw, (0, 2, 3, 1))
    dn = ('NHWC', 'HWIO', 'NHWC')

    def bn(z, g, b):
        mu = jnp.mean(z, axis=(0, 1, 2))
        var = jnp.mean((z - mu) ** 2, axis=(0, 1, 2))
        return (z - mu) * jax.lax.rsqrt(var + EPS) * g.reshape(-1) + b.reshape(-1)

    y = jax.lax.conv_general_dilated(x, w1, (1, 1), 'SAME', dimension_numbers=dn)
    y = jnp.maximum(bn(y, g1, b1), 0.0)
    z = jax.lax.conv_general_dilated(y, w2, (1, 1), 'SAME', dimension_numbers=dn)
    z = bn(z, g2, b2)
    out = jnp.maximum(z + x, 0.0)
    return jnp.transpose(out, (0, 3, 1, 2))


if __name__ == "__main__":
    # Small shapes: batch=2, in_channel=out_channel=4, spatial=16x16,
    # stride=1, shortcut=None (identity residual).
    N, C, H, W = 2, 4, 16, 16

    key = jax.random.PRNGKey(0)
    kx, k1, k2, kg1, kb1, kg2, kb2 = jax.random.split(key, 7)

    x = jax.random.normal(kx, (N, C, H, W), jnp.float32)
    # Conv weights created directly in HWIO layout (deterministic init).
    w1 = 0.1 * jax.random.normal(k1, (3, 3, C, C), jnp.float32)
    w2 = 0.1 * jax.random.normal(k2, (3, 3, C, C), jnp.float32)
    g1 = 1.0 + 0.1 * jax.random.normal(kg1, (C,), jnp.float32)
    b1 = 0.05 * jax.random.normal(kb1, (C,), jnp.float32)
    g2 = 1.0 + 0.1 * jax.random.normal(kg2, (C,), jnp.float32)
    b2 = 0.05 * jax.random.normal(kb2, (C,), jnp.float32)

    out = residual_block_forward(x, w1, g1, b1, w2, g2, b2)
    out = jax.block_until_ready(out)

    ref = reference_forward(x, w1, g1, b1, w2, g2, b2)
    # bf16 MXU inputs vs. an f32 reference (error also flows through the batch
    # statistics) -> relaxed tolerances.
    np.testing.assert_allclose(np.asarray(out), np.asarray(ref),
                               rtol=5e-2, atol=5e-2)

    print("KERNEL_OK")
</pallas_src>

<mosaic_0001>
module attributes {stable_mosaic.version = 11 : i64} {
  func.func @resblock_kernel(%arg0: memref<16x512xf32, #tpu.memory_space<vmem>>, %arg1: memref<1x512xi32, #tpu.memory_space<vmem>>, %arg2: memref<1x512xi32, #tpu.memory_space<vmem>>, %arg3: memref<16x144xbf16, #tpu.memory_space<vmem>>, %arg4: memref<16x1xf32, #tpu.memory_space<vmem>>, %arg5: memref<16x1xf32, #tpu.memory_space<vmem>>, %arg6: memref<16x144xbf16, #tpu.memory_space<vmem>>, %arg7: memref<16x1xf32, #tpu.memory_space<vmem>>, %arg8: memref<16x1xf32, #tpu.memory_space<vmem>>, %arg9: memref<16x512xf32, #tpu.memory_space<vmem>>, %arg10: memref<16x768xf32, #tpu.memory_space<vmem>>, %arg11: memref<16x768xf32, #tpu.memory_space<vmem>>, %arg12: memref<144x512xbf16, #tpu.memory_space<vmem>>) attributes {dimension_semantics = [], scalar_prefetch = 0 : i64, scratch_operands = 3 : i64, tpu.core_type = #tpu.core_type<tc>} {
    %c0 = arith.constant 0 : index
    %c0_0 = arith.constant 0 : index
    %0 = vector.load %arg1[%c0, %c0_0] : memref<1x512xi32, #tpu.memory_space<vmem>>, vector<1x512xi32>
    %c0_1 = arith.constant 0 : index
    %c0_2 = arith.constant 0 : index
    %1 = vector.load %arg2[%c0_1, %c0_2] : memref<1x512xi32, #tpu.memory_space<vmem>>, vector<1x512xi32>
    %c1_i32 = arith.constant 1 : i32
    %2 = vector.broadcast %c1_i32 : i32 to vector<1x512xi32>
    %3 = arith.cmpi sge, %0, %2 : vector<1x512xi32>
    %c15_i32 = arith.constant 15 : i32
    %4 = vector.broadcast %c15_i32 : i32 to vector<1x512xi32>
    %5 = arith.cmpi slt, %0, %4 : vector<1x512xi32>
    %c1_i32_3 = arith.constant 1 : i32
    %6 = vector.broadcast %c1_i32_3 : i32 to vector<1x512xi32>
    %7 = arith.cmpi sge, %1, %6 : vector<1x512xi32>
    %c15_i32_4 = arith.constant 15 : i32
    %8 = vector.broadcast %c15_i32_4 : i32 to vector<1x512xi32>
    %9 = arith.cmpi slt, %1, %8 : vector<1x512xi32>
    %10 = arith.andi %3, %7 : vector<1x512xi1>
    %11 = arith.andi %3, %9 : vector<1x512xi1>
    %12 = arith.andi %5, %7 : vector<1x512xi1>
    %13 = arith.andi %5, %9 : vector<1x512xi1>
    %c0_5 = arith.constant 0 : index
    %c0_6 = arith.constant 0 : index
    %14 = vector.load %arg0[%c0_5, %c0_6] : memref<16x512xf32, #tpu.memory_space<vmem>>, vector<16x512xf32>
    %c0_7 = arith.constant 0 : index
    %c128 = arith.constant 128 : index
    %15 = vector.load %arg10[%c0_7, %c128] : memref<16x768xf32, #tpu.memory_space<vmem>>, vector<16x512xf32>
    tpu.vector_store %arg10[%c0_7, %c128], %14 {strides = array<i32>} : memref<16x768xf32, #tpu.memory_space<vmem>>, vector<16x512xf32>,
    %c0_8 = arith.constant 0 : index
    %c0_9 = arith.constant 0 : index
    %16 = vector.load %arg10[%c0_8, %c0_9] : memref<16x768xf32, #tpu.memory_space<vmem>>, vector<16x768xf32>
    %17 = vector.extract_strided_slice %16 {offsets = [0, 111], sizes = [16, 512], strides = [1, 1]} : vector<16x768xf32> to vector<16x512xf32>
    %cst = arith.constant 0.000000e+00 : f32
    %18 = vector.shape_cast %10 : vector<1x512xi1> to vector<1x512xi1>
    %19 = vector.broadcast %18 : vector<1x512xi1> to vector<16x512xi1>
    %20 = vector.broadcast %cst : f32 to vector<16x512xf32>
    %21 = arith.select %19, %17, %20 : vector<16x512xi1>, vector<16x512xf32>
    %22 = arith.truncf %21 : vector<16x512xf32> to vector<16x512xbf16>
    %c0_10 = arith.constant 0 : index
    %c0_11 = arith.constant 0 : index
    %23 = vector.load %arg12[%c0_10, %c0_11] : memref<144x512xbf16, #tpu.memory_space<vmem>>, vector<16x512xbf16>
    tpu.vector_store %arg12[%c0_10, %c0_11], %22 {strides = array<i32>} : memref<144x512xbf16, #tpu.memory_space<vmem>>, vector<16x512xbf16>,
    %24 = vector.extract_strided_slice %16 {offsets = [0, 112], sizes = [16, 512], strides = [1, 1]} : vector<16x768xf32> to vector<16x512xf32>
    %cst_12 = arith.constant 0.000000e+00 : f32
    %25 = vector.shape_cast %3 : vector<1x512xi1> to vector<1x512xi1>
    %26 = vector.broadcast %25 : vector<1x512xi1> to vector<16x512xi1>
    %27 = vector.broadcast %cst_12 : f32 to vector<16x512xf32>
    %28 = arith.select %26, %24, %27 : vector<16x512xi1>, vector<16x512xf32>
    %29 = arith.truncf %28 : vector<16x512xf32> to vector<16x512xbf16>
    %c16 = arith.constant 16 : index
    %c0_13 = arith.constant 0 : index
    %30 = vector.load %arg12[%c16, %c0_13] : memref<144x512xbf16, #tpu.memory_space<vmem>>, vector<16x512xbf16>
    tpu.vector_store %arg12[%c16, %c0_13], %29 {strides = array<i32>} : memref<144x512xbf16, #tpu.memory_space<vmem>>, vector<16x512xbf16>,
    %31 = vector.extract_strided_slice %16 {offsets = [0, 113], sizes = [16, 512], strides = [1, 1]} : vector<16x768xf32> to vector<16x512xf32>
    %cst_14 = arith.constant 0.000000e+00 : f32
    %32 = vector.shape_cast %11 : vector<1x512xi1> to vector<1x512xi1>
    %33 = vector.broadcast %32 : vector<1x512xi1> to vector<16x512xi1>
    %34 = vector.broadcast %cst_14 : f32 to vector<16x512xf32>
    %35 = arith.select %33, %31, %34 : vector<16x512xi1>, vector<16x512xf32>
    %36 = arith.truncf %35 : vector<16x512xf32> to vector<16x512xbf16>
    %c32 = arith.constant 32 : index
    %c0_15 = arith.constant 0 : index
    %37 = vector.load %arg12[%c32, %c0_15] : memref<144x512xbf16, #tpu.memory_space<vmem>>, vector<16x512xbf16>
    tpu.vector_store %arg12[%c32, %c0_15], %36 {strides = array<i32>} : memref<144x512xbf16, #tpu.memory_space<vmem>>, vector<16x512xbf16>,
    %38 = vector.extract_strided_slice %16 {offsets = [0, 127], sizes = [16, 512], strides = [1, 1]} : vector<16x768xf32> to vector<16x512xf32>
    %cst_16 = arith.constant 0.000000e+00 : f32
    %39 = vector.shape_cast %7 : vector<1x512xi1> to vector<1x512xi1>
    %40 = vector.broadcast %39 : vector<1x512xi1> to vector<16x512xi1>
    %41 = vector.broadcast %cst_16 : f32 to vector<16x512xf32>
    %42 = arith.select %40, %38, %41 : vector<16x512xi1>, vector<16x512xf32>
    %43 = arith.truncf %42 : vector<16x512xf32> to vector<16x512xbf16>
    %c48 = arith.constant 48 : index
    %c0_17 = arith.constant 0 : index
    %44 = vector.load %arg12[%c48, %c0_17] : memref<144x512xbf16, #tpu.memory_space<vmem>>, vector<16x512xbf16>
    tpu.vector_store %arg12[%c48, %c0_17], %43 {strides = array<i32>} : memref<144x512xbf16, #tpu.memory_space<vmem>>, vector<16x512xbf16>,
    %45 = vector.extract_strided_slice %16 {offsets = [0, 128], sizes = [16, 512], strides = [1, 1]} : vector<16x768xf32> to vector<16x512xf32>
    %46 = arith.truncf %45 : vector<16x512xf32> to vector<16x512xbf16>
    %c64 = arith.constant 64 : index
    %c0_18 = arith.constant 0 : index
    %47 = vector.load %arg12[%c64, %c0_18] : memref<144x512xbf16, #tpu.memory_space<vmem>>, vector<16x512xbf16>
    tpu.vector_store %arg12[%c64, %c0_18], %46 {strides = array<i32>} : memref<144x512xbf16, #tpu.memory_space<vmem>>, vector<16x512xbf16>,
    %48 = vector.extract_strided_slice %16 {offsets = [0, 129], sizes = [16, 512], strides = [1, 1]} : vector<16x768xf32> to vector<16x512xf32>
    %cst_19 = arith.constant 0.000000e+00 : f32
    %49 = vector.shape_cast %9 : vector<1x512xi1> to vector<1x512xi1>
    %50 = vector.broadcast %49 : vector<1x512xi1> to vector<16x512xi1>
    %51 = vector.broadcast %cst_19 : f32 to vector<16x512xf32>
    %52 = arith.select %50, %48, %51 : vector<16x512xi1>, vector<16x512xf32>
    %53 = arith.truncf %52 : vector<16x512xf32> to vector<16x512xbf16>
    %c80 = arith.constant 80 : index
    %c0_20 = arith.constant 0 : index
    %54 = vector.load %arg12[%c80, %c0_20] : memref<144x512xbf16, #tpu.memory_space<vmem>>, vector<16x512xbf16>
    tpu.vector_store %arg12[%c80, %c0_20], %53 {strides = array<i32>} : memref<144x512xbf16, #tpu.memory_space<vmem>>, vector<16x512xbf16>,
    %55 = vector.extract_strided_slice %16 {offsets = [0, 143], sizes = [16, 512], strides = [1, 1]} : vector<16x768xf32> to vector<16x512xf32>
    %cst_21 = arith.constant 0.000000e+00 : f32
    %56 = vector.shape_cast %12 : vector<1x512xi1> to vector<1x512xi1>
    %57 = vector.broadcast %56 : vector<1x512xi1> to vector<16x512xi1>
    %58 = vector.broadcast %cst_21 : f32 to vector<16x512xf32>
    %59 = arith.select %57, %55, %58 : vector<16x512xi1>, vector<16x512xf32>
    %60 = arith.truncf %59 : vector<16x512xf32> to vector<16x512xbf16>
    %c96 = arith.constant 96 : index
    %c0_22 = arith.constant 0 : index
    %61 = vector.load %arg12[%c96, %c0_22] : memref<144x512xbf16, #tpu.memory_space<vmem>>, vector<16x512xbf16>
    tpu.vector_store %arg12[%c96, %c0_22], %60 {strides = array<i32>} : memref<144x512xbf16, #tpu.memory_space<vmem>>, vector<16x512xbf16>,
    %62 = vector.extract_strided_slice %16 {offsets = [0, 144], sizes = [16, 512], strides = [1, 1]} : vector<16x768xf32> to vector<16x512xf32>
    %cst_23 = arith.constant 0.000000e+00 : f32
    %63 = vector.shape_cast %5 : vector<1x512xi1> to vector<1x512xi1>
    %64 = vector.broadcast %63 : vector<1x512xi1> to vector<16x512xi1>
    %65 = vector.broadcast %cst_23 : f32 to vector<16x512xf32>
    %66 = arith.select %64, %62, %65 : vector<16x512xi1>, vector<16x512xf32>
    %67 = arith.truncf %66 : vector<16x512xf32> to vector<16x512xbf16>
    %c112 = arith.constant 112 : index
    %c0_24 = arith.constant 0 : index
    %68 = vector.load %arg12[%c112, %c0_24] : memref<144x512xbf16, #tpu.memory_space<vmem>>, vector<16x512xbf16>
    tpu.vector_store %arg12[%c112, %c0_24], %67 {strides = array<i32>} : memref<144x512xbf16, #tpu.memory_space<vmem>>, vector<16x512xbf16>,
    %69 = vector.extract_strided_slice %16 {offsets = [0, 145], sizes = [16, 512], strides = [1, 1]} : vector<16x768xf32> to vector<16x512xf32>
    %cst_25 = arith.constant 0.000000e+00 : f32
    %70 = vector.shape_cast %13 : vector<1x512xi1> to vector<1x512xi1>
    %71 = vector.broadcast %70 : vector<1x512xi1> to vector<16x512xi1>
    %72 = vector.broadcast %cst_25 : f32 to vector<16x512xf32>
    %73 = arith.select %71, %69, %72 : vector<16x512xi1>, vector<16x512xf32>
    %74 = arith.truncf %73 : vector<16x512xf32> to vector<16x512xbf16>
    %c128_26 = arith.constant 128 : index
    %c0_27 = arith.constant 0 : index
    %75 = vector.load %arg12[%c128_26, %c0_27] : memref<144x512xbf16, #tpu.memory_space<vmem>>, vector<16x512xbf16>
    tpu.vector_store %arg12[%c128_26, %c0_27], %74 {strides = array<i32>} : memref<144x512xbf16, #tpu.memory_space<vmem>>, vector<16x512xbf16>,
    %c0_28 = arith.constant 0 : index
    %c0_29 = arith.constant 0 : index
    %76 = vector.load %arg3[%c0_28, %c0_29] : memref<16x144xbf16, #tpu.memory_space<vmem>>, vector<16x144xbf16>
    %c0_30 = arith.constant 0 : index
    %c0_31 = arith.constant 0 : index
    %77 = vector.load %arg12[%c0_30, %c0_31] : memref<144x512xbf16, #tpu.memory_space<vmem>>, vector<144x512xbf16>
    %cst_32 = arith.constant dense<0.000000e+00> : vector<16x512xf32>
    %78 = tpu.matmul %76, %77, %cst_32 {dimension_numbers = #tpu.dot_dimension_numbers<[1], [0], [0], [1], [0, 0, 1, 1], [], []>} : vector<16x144xbf16>, vector<144x512xbf16>, vector<16x512xf32> -> vector<16x512xf32>
    %c0_33 = arith.constant 0 : index
    %c0_34 = arith.constant 0 : index
    %79 = vector.load %arg4[%c0_33, %c0_34] : memref<16x1xf32, #tpu.memory_space<vmem>>, vector<16x1xf32>
    %c0_35 = arith.constant 0 : index
    %c0_36 = arith.constant 0 : index
    %80 = vector.load %arg5[%c0_35, %c0_36] : memref<16x1xf32, #tpu.memory_space<vmem>>, vector<16x1xf32>
    %cst_37 = arith.constant dense<0.000000e+00> : vector<16xf32>
    %81 = vector.multi_reduction <add>, %78, %cst_37 [1] : vector<16x512xf32> to vector<16xf32>
    %82 = vector.shape_cast %81 : vector<16xf32> to vector<16x1xf32>
    %cst_38 = arith.constant 5.120000e+02 : f32
    %83 = vector.broadcast %cst_38 : f32 to vector<16x1xf32>
    %84 = arith.divf %82, %83 : vector<16x1xf32>
    %85 = vector.broadcast %84 : vector<16x1xf32> to vector<16x512xf32>
    %86 = arith.subf %78, %85 : vector<16x512xf32>
    %87 = arith.mulf %86, %86 : vector<16x512xf32>
    %cst_39 = arith.constant dense<0.000000e+00> : vector<16xf32>
    %88 = vector.multi_reduction <add>, %87, %cst_39 [1] : vector<16x512xf32> to vector<16xf32>
    %89 = vector.shape_cast %88 : vector<16xf32> to vector<16x1xf32>
    %cst_40 = arith.constant 5.120000e+02 : f32
    %90 = vector.broadcast %cst_40 : f32 to vector<16x1xf32>
    %91 = arith.divf %89, %90 : vector<16x1xf32>
    %92 = vector.broadcast %84 : vector<16x1xf32> to vector<16x512xf32>
    %93 = arith.subf %78, %92 : vector<16x512xf32>
    %cst_41 = arith.constant 9.99999974E-6 : f32
    %94 = vector.broadcast %cst_41 : f32 to vector<16x1xf32>
    %95 = arith.addf %91, %94 : vector<16x1xf32>
    %96 = math.rsqrt %95 : vector<16x1xf32>
    %97 = vector.broadcast %96 : vector<16x1xf32> to vector<16x512xf32>
    %98 = arith.mulf %93, %97 : vector<16x512xf32>
    %99 = vector.broadcast %79 : vector<16x1xf32> to vector<16x512xf32>
    %100 = arith.mulf %98, %99 : vector<16x512xf32>
    %101 = vector.broadcast %80 : vector<16x1xf32> to vector<16x512xf32>
    %102 = arith.addf %100, %101 : vector<16x512xf32>
    %cst_42 = arith.constant 0.000000e+00 : f32
    %103 = vector.broadcast %cst_42 : f32 to vector<16x512xf32>
    %104 = arith.maximumf %102, %103 : vector<16x512xf32>
    %c0_43 = arith.constant 0 : index
    %c128_44 = arith.constant 128 : index
    %105 = vector.load %arg11[%c0_43, %c128_44] : memref<16x768xf32, #tpu.memory_space<vmem>>, vector<16x512xf32>
    tpu.vector_store %arg11[%c0_43, %c128_44], %104 {strides = array<i32>} : memref<16x768xf32, #tpu.memory_space<vmem>>, vector<16x512xf32>,
    %c0_45 = arith.constant 0 : index
    %c0_46 = arith.constant 0 : index
    %106 = vector.load %arg11[%c0_45, %c0_46] : memref<16x768xf32, #tpu.memory_space<vmem>>, vector<16x768xf32>
    %107 = vector.extract_strided_slice %106 {offsets = [0, 111], sizes = [16, 512], strides = [1, 1]} : vector<16x768xf32> to vector<16x512xf32>
    %cst_47 = arith.constant 0.000000e+00 : f32
    %108 = vector.shape_cast %10 : vector<1x512xi1> to vector<1x512xi1>
    %109 = vector.broadcast %108 : vector<1x512xi1> to vector<16x512xi1>
    %110 = vector.broadcast %cst_47 : f32 to vector<16x512xf32>
    %111 = arith.select %109, %107, %110 : vector<16x512xi1>, vector<16x512xf32>
    %112 = arith.truncf %111 : vector<16x512xf32> to vector<16x512xbf16>
    %c0_48 = arith.constant 0 : index
    %c0_49 = arith.constant 0 : index
    %113 = vector.load %arg12[%c0_48, %c0_49] : memref<144x512xbf16, #tpu.memory_space<vmem>>, vector<16x512xbf16>
    tpu.vector_store %arg12[%c0_48, %c0_49], %112 {strides = array<i32>} : memref<144x512xbf16, #tpu.memory_space<vmem>>, vector<16x512xbf16>,
    %114 = vector.extract_strided_slice %106 {offsets = [0, 112], sizes = [16, 512], strides = [1, 1]} : vector<16x768xf32> to vector<16x512xf32>
    %cst_50 = arith.constant 0.000000e+00 : f32
    %115 = vector.shape_cast %3 : vector<1x512xi1> to vector<1x512xi1>
    %116 = vector.broadcast %115 : vector<1x512xi1> to vector<16x512xi1>
    %117 = vector.broadcast %cst_50 : f32 to vector<16x512xf32>
    %118 = arith.select %116, %114, %117 : vector<16x512xi1>, vector<16x512xf32>
    %119 = arith.truncf %118 : vector<16x512xf32> to vector<16x512xbf16>
    %c16_51 = arith.constant 16 : index
    %c0_52 = arith.constant 0 : index
    %120 = vector.load %arg12[%c16_51, %c0_52] : memref<144x512xbf16, #tpu.memory_space<vmem>>, vector<16x512xbf16>
    tpu.vector_store %arg12[%c16_51, %c0_52], %119 {strides = array<i32>} : memref<144x512xbf16, #tpu.memory_space<vmem>>, vector<16x512xbf16>,
    %121 = vector.extract_strided_slice %106 {offsets = [0, 113], sizes = [16, 512], strides = [1, 1]} : vector<16x768xf32> to vector<16x512xf32>
    %cst_53 = arith.constant 0.000000e+00 : f32
    %122 = vector.shape_cast %11 : vector<1x512xi1> to vector<1x512xi1>
    %123 = vector.broadcast %122 : vector<1x512xi1> to vector<16x512xi1>
    %124 = vector.broadcast %cst_53 : f32 to vector<16x512xf32>
    %125 = arith.select %123, %121, %124 : vector<16x512xi1>, vector<16x512xf32>
    %126 = arith.truncf %125 : vector<16x512xf32> to vector<16x512xbf16>
    %c32_54 = arith.constant 32 : index
    %c0_55 = arith.constant 0 : index
    %127 = vector.load %arg12[%c32_54, %c0_55] : memref<144x512xbf16, #tpu.memory_space<vmem>>, vector<16x512xbf16>
    tpu.vector_store %arg12[%c32_54, %c0_55], %126 {strides = array<i32>} : memref<144x512xbf16, #tpu.memory_space<vmem>>, vector<16x512xbf16>,
    %128 = vector.extract_strided_slice %106 {offsets = [0, 127], sizes = [16, 512], strides = [1, 1]} : vector<16x768xf32> to vector<16x512xf32>
    %cst_56 = arith.constant 0.000000e+00 : f32
    %129 = vector.shape_cast %7 : vector<1x512xi1> to vector<1x512xi1>
    %130 = vector.broadcast %129 : vector<1x512xi1> to vector<16x512xi1>
    %131 = vector.broadcast %cst_56 : f32 to vector<16x512xf32>
    %132 = arith.select %130, %128, %131 : vector<16x512xi1>, vector<16x512xf32>
    %133 = arith.truncf %132 : vector<16x512xf32> to vector<16x512xbf16>
    %c48_57 = arith.constant 48 : index
    %c0_58 = arith.constant 0 : index
    %134 = vector.load %arg12[%c48_57, %c0_58] : memref<144x512xbf16, #tpu.memory_space<vmem>>, vector<16x512xbf16>
    tpu.vector_store %arg12[%c48_57, %c0_58], %133 {strides = array<i32>} : memref<144x512xbf16, #tpu.memory_space<vmem>>, vector<16x512xbf16>,
    %135 = vector.extract_strided_slice %106 {offsets = [0, 128], sizes = [16, 512], strides = [1, 1]} : vector<16x768xf32> to vector<16x512xf32>
    %136 = arith.truncf %135 : vector<16x512xf32> to vector<16x512xbf16>
    %c64_59 = arith.constant 64 : index
    %c0_60 = arith.constant 0 : index
    %137 = vector.load %arg12[%c64_59, %c0_60] : memref<144x512xbf16, #tpu.memory_space<vmem>>, vector<16x512xbf16>
    tpu.vector_store %arg12[%c64_59, %c0_60], %136 {strides = array<i32>} : memref<144x512xbf16, #tpu.memory_space<vmem>>, vector<16x512xbf16>,
    %138 = vector.extract_strided_slice %106 {offsets = [0, 129], sizes = [16, 512], strides = [1, 1]} : vector<16x768xf32> to vector<16x512xf32>
    %cst_61 = arith.constant 0.000000e+00 : f32
    %139 = vector.shape_cast %9 : vector<1x512xi1> to vector<1x512xi1>
    %140 = vector.broadcast %139 : vector<1x512xi1> to vector<16x512xi1>
    %141 = vector.broadcast %cst_61 : f32 to vector<16x512xf32>
    %142 = arith.select %140, %138, %141 : vector<16x512xi1>, vector<16x512xf32>
    %143 = arith.truncf %142 : vector<16x512xf32> to vector<16x512xbf16>
    %c80_62 = arith.constant 80 : index
    %c0_63 = arith.constant 0 : index
    %144 = vector.load %arg12[%c80_62, %c0_63] : memref<144x512xbf16, #tpu.memory_space<vmem>>, vector<16x512xbf16>
    tpu.vector_store %arg12[%c80_62, %c0_63], %143 {strides = array<i32>} : memref<144x512xbf16, #tpu.memory_space<vmem>>, vector<16x512xbf16>,
    %145 = vector.extract_strided_slice %106 {offsets = [0, 143], sizes = [16, 512], strides = [1, 1]} : vector<16x768xf32> to vector<16x512xf32>
    %cst_64 = arith.constant 0.000000e+00 : f32
    %146 = vector.shape_cast %12 : vector<1x512xi1> to vector<1x512xi1>
    %147 = vector.broadcast %146 : vector<1x512xi1> to vector<16x512xi1>
    %148 = vector.broadcast %cst_64 : f32 to vector<16x512xf32>
    %149 = arith.select %147, %145, %148 : vector<16x512xi1>, vector<16x512xf32>
    %150 = arith.truncf %149 : vector<16x512xf32> to vector<16x512xbf16>
    %c96_65 = arith.constant 96 : index
    %c0_66 = arith.constant 0 : index
    %151 = vector.load %arg12[%c96_65, %c0_66] : memref<144x512xbf16, #tpu.memory_space<vmem>>, vector<16x512xbf16>
    tpu.vector_store %arg12[%c96_65, %c0_66], %150 {strides = array<i32>} : memref<144x512xbf16, #tpu.memory_space<vmem>>, vector<16x512xbf16>,
    %152 = vector.extract_strided_slice %106 {offsets = [0, 144], sizes = [16, 512], strides = [1, 1]} : vector<16x768xf32> to vector<16x512xf32>
    %cst_67 = arith.constant 0.000000e+00 : f32
    %153 = vector.shape_cast %5 : vector<1x512xi1> to vector<1x512xi1>
    %154 = vector.broadcast %153 : vector<1x512xi1> to vector<16x512xi1>
    %155 = vector.broadcast %cst_67 : f32 to vector<16x512xf32>
    %156 = arith.select %154, %152, %155 : vector<16x512xi1>, vector<16x512xf32>
    %157 = arith.truncf %156 : vector<16x512xf32> to vector<16x512xbf16>
    %c112_68 = arith.constant 112 : index
    %c0_69 = arith.constant 0 : index
    %158 = vector.load %arg12[%c112_68, %c0_69] : memref<144x512xbf16, #tpu.memory_space<vmem>>, vector<16x512xbf16>
    tpu.vector_store %arg12[%c112_68, %c0_69], %157 {strides = array<i32>} : memref<144x512xbf16, #tpu.memory_space<vmem>>, vector<16x512xbf16>,
    %159 = vector.extract_strided_slice %106 {offsets = [0, 145], sizes = [16, 512], strides = [1, 1]} : vector<16x768xf32> to vector<16x512xf32>
    %cst_70 = arith.constant 0.000000e+00 : f32
    %160 = vector.shape_cast %13 : vector<1x512xi1> to vector<1x512xi1>
    %161 = vector.broadcast %160 : vector<1x512xi1> to vector<16x512xi1>
    %162 = vector.broadcast %cst_70 : f32 to vector<16x512xf32>
    %163 = arith.select %161, %159, %162 : vector<16x512xi1>, vector<16x512xf32>
    %164 = arith.truncf %163 : vector<16x512xf32> to vector<16x512xbf16>
    %c128_71 = arith.constant 128 : index
    %c0_72 = arith.constant 0 : index
    %165 = vector.load %arg12[%c128_71, %c0_72] : memref<144x512xbf16, #tpu.memory_space<vmem>>, vector<16x512xbf16>
    tpu.vector_store %arg12[%c128_71, %c0_72], %164 {strides = array<i32>} : memref<144x512xbf16, #tpu.memory_space<vmem>>, vector<16x512xbf16>,
    %c0_73 = arith.constant 0 : index
    %c0_74 = arith.constant 0 : index
    %166 = vector.load %arg6[%c0_73, %c0_74] : memref<16x144xbf16, #tpu.memory_space<vmem>>, vector<16x144xbf16>
    %c0_75 = arith.constant 0 : index
    %c0_76 = arith.constant 0 : index
    %167 = vector.load %arg12[%c0_75, %c0_76] : memref<144x512xbf16, #tpu.memory_space<vmem>>, vector<144x512xbf16>
    %cst_77 = arith.constant dense<0.000000e+00> : vector<16x512xf32>
    %168 = tpu.matmul %166, %167, %cst_77 {dimension_numbers = #tpu.dot_dimension_numbers<[1], [0], [0], [1], [0, 0, 1, 1], [], []>} : vector<16x144xbf16>, vector<144x512xbf16>, vector<16x512xf32> -> vector<16x512xf32>
    %c0_78 = arith.constant 0 : index
    %c0_79 = arith.constant 0 : index
    %169 = vector.load %arg7[%c0_78, %c0_79] : memref<16x1xf32, #tpu.memory_space<vmem>>, vector<16x1xf32>
    %c0_80 = arith.constant 0 : index
    %c0_81 = arith.constant 0 : index
    %170 = vector.load %arg8[%c0_80, %c0_81] : memref<16x1xf32, #tpu.memory_space<vmem>>, vector<16x1xf32>
    %cst_82 = arith.constant dense<0.000000e+00> : vector<16xf32>
    %171 = vector.multi_reduction <add>, %168, %cst_82 [1] : vector<16x512xf32> to vector<16xf32>
    %172 = vector.shape_cast %171 : vector<16xf32> to vector<16x1xf32>
    %cst_83 = arith.constant 5.120000e+02 : f32
    %173 = vector.broadcast %cst_83 : f32 to vector<16x1xf32>
    %174 = arith.divf %172, %173 : vector<16x1xf32>
    %175 = vector.broadcast %174 : vector<16x1xf32> to vector<16x512xf32>
    %176 = arith.subf %168, %175 : vector<16x512xf32>
    %177 = arith.mulf %176, %176 : vector<16x512xf32>
    %cst_84 = arith.constant dense<0.000000e+00> : vector<16xf32>
    %178 = vector.multi_reduction <add>, %177, %cst_84 [1] : vector<16x512xf32> to vector<16xf32>
    %179 = vector.shape_cast %178 : vector<16xf32> to vector<16x1xf32>
    %cst_85 = arith.constant 5.120000e+02 : f32
    %180 = vector.broadcast %cst_85 : f32 to vector<16x1xf32>
    %181 = arith.divf %179, %180 : vector<16x1xf32>
    %182 = vector.broadcast %174 : vector<16x1xf32> to vector<16x512xf32>
    %183 = arith.subf %168, %182 : vector<16x512xf32>
    %cst_86 = arith.constant 9.99999974E-6 : f32
    %184 = vector.broadcast %cst_86 : f32 to vector<16x1xf32>
    %185 = arith.addf %181, %184 : vector<16x1xf32>
    %186 = math.rsqrt %185 : vector<16x1xf32>
    %187 = vector.broadcast %186 : vector<16x1xf32> to vector<16x512xf32>
    %188 = arith.mulf %183, %187 : vector<16x512xf32>
    %189 = vector.broadcast %169 : vector<16x1xf32> to vector<16x512xf32>
    %190 = arith.mulf %188, %189 : vector<16x512xf32>
    %191 = vector.broadcast %170 : vector<16x1xf32> to vector<16x512xf32>
    %192 = arith.addf %190, %191 : vector<16x512xf32>
    %193 = arith.addf %192, %14 : vector<16x512xf32>
    %cst_87 = arith.constant 0.000000e+00 : f32
    %194 = vector.broadcast %cst_87 : f32 to vector<16x512xf32>
    %195 = arith.maximumf %193, %194 : vector<16x512xf32>
    %c0_88 = arith.constant 0 : index
    %c0_89 = arith.constant 0 : index
    %196 = vector.load %arg9[%c0_88, %c0_89] : memref<16x512xf32, #tpu.memory_space<vmem>>, vector<16x512xf32>
    tpu.vector_store %arg9[%c0_88, %c0_89], %195 {strides = array<i32>} : memref<16x512xf32, #tpu.memory_space<vmem>>, vector<16x512xf32>,
    return
  }
}

</mosaic_0001>

<llo_original>
// kernel: residual_block_forward.1
$region0: #{residual_block_forward.1}
  #allocation0 [shape = 'u32[]', space=smem, size = 0x4, offset = 0x4, fixed_abs, tag = 'smem constant byte address 0x4 - core index']
  #allocation1 [shape = 'u32[144,128]{1,0:T(1,128)}', space=vmem, size = 0x12000, scoped, tag = 'internal scratch']
  #allocation2 [shape = 'f32[16,768]{1,0:T(8,128)}', space=vmem, size = 0xc000, scoped, tag = 'scratch operand']
  #allocation3 [shape = 'f32[16,768]{1,0:T(8,128)}', space=vmem, size = 0xc000, scoped, tag = 'scratch operand']
  #allocation4 [shape = 'bf16[144,512]{1,0:T(16,128)(2,1)}', space=vmem, size = 0x24000, scoped, tag = 'scratch operand']
  %s0 = inlined_call_operand.vmem [shape: f32[16,512], index: 0, kind: input, shape index: {}]
  %s1 = inlined_call_operand.vmem [shape: s32[1,512], index: 1, kind: input, shape index: {}]
  %s2 = inlined_call_operand.vmem [shape: s32[1,512], index: 2, kind: input, shape index: {}]
  %s3 = inlined_call_operand.vmem [shape: bf16[16,144], index: 3, kind: input, shape index: {}]
  %s4 = inlined_call_operand.vmem [shape: f32[16,1], index: 4, kind: input, shape index: {}]
  %s5 = inlined_call_operand.vmem [shape: f32[16,1], index: 5, kind: input, shape index: {}]
  %s6 = inlined_call_operand.vmem [shape: bf16[16,144], index: 6, kind: input, shape index: {}]
  %s7 = inlined_call_operand.vmem [shape: f32[16,1], index: 7, kind: input, shape index: {}]
  %s8 = inlined_call_operand.vmem [shape: f32[16,1], index: 8, kind: input, shape index: {}]
  %s9 = inlined_call_operand.vmem [shape: f32[16,512], index: 9, kind: output, shape index: {}]
  %s10 = sld [smem:[#allocation0]]
  $region46: #{residual_block_forward.1} parent=0
    _
  %s12 = ssub.s32 1, %s10
  %s13 = scalar_select 0, %s12, %s10
  // Predicated region
  $region2: #{residual_block_forward.1} parent=0 // pred_check
    _
  $region3: #{residual_block_forward.1} parent=0 // pred_check_branch
    %15 = sbr.rel (0) target = $region5
  $region4: #{residual_block_forward.1} parent=0 // pred_region
    _
  $region5: #{residual_block_forward.1} parent=0 // pred_fallthru
    _
  // Predicated region
  $region6: #{residual_block_forward.1} parent=0 // pred_check
    _
  $region7: #{residual_block_forward.1} parent=0 // pred_check_branch
    %17 = sbr.rel (0) target = $region9
  $region8: #{residual_block_forward.1} parent=0 // pred_region
    _
  $region9: #{residual_block_forward.1} parent=0 // pred_fallthru
    _
  // Predicated region
  $region10: #{residual_block_forward.1} parent=0 // pred_check
    _
  $region11: #{residual_block_forward.1} parent=0 // pred_check_branch
    %19 = sbr.rel (0) target = $region13
  $region12: #{residual_block_forward.1} parent=0 // pred_region
    _
  $region13: #{residual_block_forward.1} parent=0 // pred_fallthru
    _
  // Predicated region
  $region14: #{residual_block_forward.1} parent=0 // pred_check
    _
  $region15: #{residual_block_forward.1} parent=0 // pred_check_branch
    %21 = sbr.rel (0) target = $region17
  $region16: #{residual_block_forward.1} parent=0 // pred_region
    _
  $region17: #{residual_block_forward.1} parent=0 // pred_fallthru
    _
  // Predicated region
  $region18: #{residual_block_forward.1} parent=0 // pred_check
    _
  $region19: #{residual_block_forward.1} parent=0 // pred_check_branch
    %23 = sbr.rel (0) target = $region21
  $region20: #{residual_block_forward.1} parent=0 // pred_region
    _
  $region21: #{residual_block_forward.1} parent=0 // pred_fallthru
    _
  // Predicated region
  $region22: #{residual_block_forward.1} parent=0 // pred_check
    _
  $region23: #{residual_block_forward.1} parent=0 // pred_check_branch
    %25 = sbr.rel (0) target = $region25
  $region24: #{residual_block_forward.1} parent=0 // pred_region
    _
  $region25: #{residual_block_forward.1} parent=0 // pred_fallthru
    _
  // Predicated region
  $region26: #{residual_block_forward.1} parent=0 // pred_check
    _
  $region27: #{residual_block_forward.1} parent=0 // pred_check_branch
    %27 = sbr.rel (0) target = $region29
  $region28: #{residual_block_forward.1} parent=0 // pred_region
    _
  $region29: #{residual_block_forward.1} parent=0 // pred_fallthru
    _
  // Predicated region
  $region30: #{residual_block_forward.1} parent=0 // pred_check
    _
  $region31: #{residual_block_forward.1} parent=0 // pred_check_branch
    %29 = sbr.rel (0) target = $region33
  $region32: #{residual_block_forward.1} parent=0 // pred_region
    _
  $region33: #{residual_block_forward.1} parent=0 // pred_fallthru
    _
  // Predicated region
  $region34: #{residual_block_forward.1} parent=0 // pred_check
    _
  $region35: #{residual_block_forward.1} parent=0 // pred_check_branch
    %31 = sbr.rel (0) target = $region37
  $region36: #{residual_block_forward.1} parent=0 // pred_region
    _
  $region37: #{residual_block_forward.1} parent=0 // pred_fallthru
    _
  %v33 = vld [vmem:[%s1] sm:$0xf]
  %v34 = vld [vmem:[%s2] sm:$0xf]
  %vm35 = vcmp.ge.s32.totalorder %v33, 1
  %vm36 = vcmp.lt.s32.totalorder %v33, 15
  %vm37 = vcmp.ge.s32.totalorder %v34, 1
  %vm38 = vcmp.lt.s32.totalorder %v34, 15
  %vm39 = vmand %vm35, %vm37
  %vm40 = vmand %vm35, %vm38
  %vm41 = vmand %vm36, %vm37
  %vm42 = vmand %vm36, %vm38
  %v43 = vld [vmem:[%s0] sm:$0xff]
  %v44 = vld [vmem:[%s0 + $0x8] sm:$0xff]
  %v45 = vld [vmem:[%s0 + $0x10] sm:$0xff]
  %v46 = vld [vmem:[%s0 + $0x18] sm:$0xff]
  %v47 = vld [vmem:[%s0 + $0x20] sm:$0xff]
  %v48 = vld [vmem:[%s0 + $0x28] sm:$0xff]
  %v49 = vld [vmem:[%s0 + $0x30] sm:$0xff]
  %v50 = vld [vmem:[%s0 + $0x38] sm:$0xff]
  %51 = vst [vmem:[#allocation2 + $0x8] sm:$0xff] %v43
  %52 = vst [vmem:[#allocation2 + $0x10] sm:$0xff] %v44
  %53 = vst [vmem:[#allocation2 + $0x18] sm:$0xff] %v45
  %54 = vst [vmem:[#allocation2 + $0x20] sm:$0xff] %v46
  %55 = vst [vmem:[#allocation2 + $0x38] sm:$0xff] %v47
  %56 = vst [vmem:[#allocation2 + $0x40] sm:$0xff] %v48
  %57 = vst [vmem:[#allocation2 + $0x48] sm:$0xff] %v49
  %58 = vst [vmem:[#allocation2 + $0x50] sm:$0xff] %v50
  %v59 = vld [vmem:[#allocation2] sm:$0xff]
  %v60 = vld [vmem:[#allocation2 + $0x8] sm:$0xff]
  %v61 = vld [vmem:[#allocation2 + $0x10] sm:$0xff]
  %v62 = vld [vmem:[#allocation2 + $0x18] sm:$0xff]
  %v63 = vld [vmem:[#allocation2 + $0x20] sm:$0xff]
  %v64 = vld [vmem:[#allocation2 + $0x28] sm:$0xff]
  %v65 = vld [vmem:[#allocation2 + $0x30] sm:$0xff]
  %v66 = vld [vmem:[#allocation2 + $0x38] sm:$0xff]
  %v67 = vld [vmem:[#allocation2 + $0x40] sm:$0xff]
  %v68 = vld [vmem:[#allocation2 + $0x48] sm:$0xff]
  %v69 = vld [vmem:[#allocation2 + $0x50] sm:$0xff]
  %v70 = vld [vmem:[#allocation2 + $0x58] sm:$0xff]
  %v71 = vsel %vm39, 1, 0
  %v72 = vlaneseq
  %v73 = vshrl.u32 %v72, 7
  %v74 = vsub.s32 0, %v73
  %v75 = vrot.slane %v71, %v74
  %v76 = vlaneseq
  %v77 = vshrl.u32 %v76, 7
  %v78 = vsub.s32 1, %v77
  %v79 = vrot.slane %v71, %v78
  %v80 = vlaneseq
  %v81 = vshrl.u32 %v80, 7
  %v82 = vsub.s32 2, %v81
  %v83 = vrot.slane %v71, %v82
  %v84 = vlaneseq
  %v85 = vshrl.u32 %v84, 7
  %v86 = vsub.s32 3, %v85
  %v87 = vrot.slane %v71, %v86
  %vm88 = vcmp.eq.s32.totalorder %v75, 1
  %vm89 = vcmp.eq.s32.totalorder %v79, 1
  %vm90 = vcmp.eq.s32.totalorder %v83, 1
  %vm91 = vcmp.eq.s32.totalorder %v87, 1
  %102 = vrot.lane.b32.xlu0 %v59, 17
  %v103 = vpop.permute.xlu0 %102
  %104 = vrot.lane.b32.xlu0 %v60, 17
  %v105 = vpop.permute.xlu0 %104
  %106 = vrot.lane.b32.xlu0 %v61, 17
  %v107 = vpop.permute.xlu0 %106
  %108 = vrot.lane.b32.xlu0 %v62, 17
  %v109 = vpop.permute.xlu0 %108
  %110 = vrot.lane.b32.xlu0 %v63, 17
  %v111 = vpop.permute.xlu0 %110
  %112 = vrot.lane.b32.xlu0 %v65, 17
  %v113 = vpop.permute.xlu0 %112
  %114 = vrot.lane.b32.xlu0 %v66, 17
  %v115 = vpop.permute.xlu0 %114
  %116 = vrot.lane.b32.xlu0 %v67, 17
  %v117 = vpop.permute.xlu0 %116
  %118 = vrot.lane.b32.xlu0 %v68, 17
  %v119 = vpop.permute.xlu0 %118
  %120 = vrot.lane.b32.xlu0 %v69, 17
  %v121 = vpop.permute.xlu0 %120
  %vm122 = vcmask 138240
  %v123 = vsel %vm122, %v103, %v105
  %v124 = vsel %vm122, %v105, %v107
  %v125 = vsel %vm122, %v107, %v109
  %v126 = vsel %vm122, %v109, %v111
  %v127 = vsel %vm122, %v113, %v115
  %v128 = vsel %vm122, %v115, %v117
  %v129 = vsel %vm122, %v117, %v119
  %v130 = vsel %vm122, %v119, %v121
  %v139 = vsel %vm88, %v123, 0.0
  %v140 = vsel %vm89, %v124, 0.0
  %v141 = vsel %vm90, %v125, 0.0
  %v142 = vsel %vm91, %v126, 0.0
  %v143 = vsel %vm88, %v127, 0.0
  %v144 = vsel %vm89, %v128, 0.0
  %v145 = vsel %vm90, %v129, 0.0
  %v146 = vsel %vm91, %v130, 0.0
  %v147 = vpack.c.bf16 %v143, %v139
  %v148 = vpack.c.bf16 %v144, %v140
  %v149 = vpack.c.bf16 %v145, %v141
  %v150 = vpack.c.bf16 %v146, %v142
  %151 = vst [vmem:[#allocation4] sm:$0xff] %v147
  %152 = vst [vmem:[#allocation4 + $0x8] sm:$0xff] %v148
  %153 = vst [vmem:[#allocation4 + $0x10] sm:$0xff] %v149
  %154 = vst [vmem:[#allocation4 + $0x18] sm:$0xff] %v150
  %v155 = vsel %vm35, 1, 0
  %v156 = vlaneseq
  %v157 = vshrl.u32 %v156, 7
  %v158 = vsub.s32 0, %v157
  %v159 = vrot.slane %v155, %v158
  %v160 = vlaneseq
  %v161 = vshrl.u32 %v160, 7
  %v162 = vsub.s32 1, %v161
  %v163 = vrot.slane %v155, %v162
  %v164 = vlaneseq
  %v165 = vshrl.u32 %v164, 7
  %v166 = vsub.s32 2, %v165
  %v167 = vrot.slane %v155, %v166
  %v168 = vlaneseq
  %v169 = vshrl.u32 %v168, 7
  %v170 = vsub.s32 3, %v169
  %v171 = vrot.slane %v155, %v170
  %vm172 = vcmp.eq.s32.totalorder %v159, 1
  %vm173 = vcmp.eq.s32.totalorder %v163, 1
  %vm174 = vcmp.eq.s32.totalorder %v167, 1
  %vm175 = vcmp.eq.s32.totalorder %v171, 1
  %176 = vrot.lane.b32.xlu0 %v59, 16
  %v177 = vpop.permute.xlu0 %176
  %178 = vrot.lane.b32.xlu0 %v60, 16
  %v179 = vpop.permute.xlu0 %178
  %180 = vrot.lane.b32.xlu0 %v61, 16
  %v181 = vpop.permute.xlu0 %180
  %182 = vrot.lane.b32.xlu0 %v62, 16
  %v183 = vpop.permute.xlu0 %182
  %184 = vrot.lane.b32.xlu0 %v63, 16
  %v185 = vpop.permute.xlu0 %184
  %186 = vrot.lane.b32.xlu0 %v65, 16
  %v187 = vpop.permute.xlu0 %186
  %188 = vrot.lane.b32.xlu0 %v66, 16
  %v189 = vpop.permute.xlu0 %188
  %190 = vrot.lane.b32.xlu0 %v67, 16
  %v191 = vpop.permute.xlu0 %190
  %192 = vrot.lane.b32.xlu0 %v68, 16
  %v193 = vpop.permute.xlu0 %192
  %194 = vrot.lane.b32.xlu0 %v69, 16
  %v195 = vpop.permute.xlu0 %194
  %vm196 = vcmask 130048
  %v197 = vsel %vm196, %v177, %v179
  %v198 = vsel %vm196, %v179, %v181
  %v199 = vsel %vm196, %v181, %v183
  %v200 = vsel %vm196, %v183, %v185
  %v201 = vsel %vm196, %v187, %v189
  %v202 = vsel %vm196, %v189, %v191
  %v203 = vsel %vm196, %v191, %v193
  %v204 = vsel %vm196, %v193, %v195
  %v213 = vsel %vm172, %v197, 0.0
  %v214 = vsel %vm173, %v198, 0.0
  %v215 = vsel %vm174, %v199, 0.0
  %v216 = vsel %vm175, %v200, 0.0
  %v217 = vsel %vm172, %v201, 0.0
  %v218 = vsel %vm173, %v202, 0.0
  %v219 = vsel %vm174, %v203, 0.0
  %v220 = vsel %vm175, %v204, 0.0
  %v221 = vpack.c.bf16 %v217, %v213
  %v222 = vpack.c.bf16 %v218, %v214
  %v223 = vpack.c.bf16 %v219, %v215
  %v224 = vpack.c.bf16 %v220, %v216
  %225 = vst [vmem:[#allocation4 + $0x20] sm:$0xff] %v221
  %226 = vst [vmem:[#allocation4 + $0x28] sm:$0xff] %v222
  %227 = vst [vmem:[#allocation4 + $0x30] sm:$0xff] %v223
  %228 = vst [vmem:[#allocation4 + $0x38] sm:$0xff] %v224
  %v229 = vsel %vm40, 1, 0
  %v230 = vlaneseq
  %v231 = vshrl.u32 %v230, 7
  %v232 = vsub.s32 0, %v231
  %v233 = vrot.slane %v229, %v232
  %v234 = vlaneseq
  %v235 = vshrl.u32 %v234, 7
  %v236 = vsub.s32 1, %v235
  %v237 = vrot.slane %v229, %v236
  %v238 = vlaneseq
  %v239 = vshrl.u32 %v238, 7
  %v240 = vsub.s32 2, %v239
  %v241 = vrot.slane %v229, %v240
  %v242 = vlaneseq
  %v243 = vshrl.u32 %v242, 7
  %v244 = vsub.s32 3, %v243
  %v245 = vrot.slane %v229, %v244
  %vm246 = vcmp.eq.s32.totalorder %v233, 1
  %vm247 = vcmp.eq.s32.totalorder %v237, 1
  %vm248 = vcmp.eq.s32.totalorder %v241, 1
  %vm249 = vcmp.eq.s32.totalorder %v245, 1
  %250 = vrot.lane.b32.xlu0 %v59, 15
  %v251 = vpop.permute.xlu0 %250
  %252 = vrot.lane.b32.xlu0 %v60, 15
  %v253 = vpop.permute.xlu0 %252
  %254 = vrot.lane.b32.xlu0 %v61, 15
  %v255 = vpop.permute.xlu0 %254
  %256 = vrot.lane.b32.xlu0 %v62, 15
  %v257 = vpop.permute.xlu0 %256
  %258 = vrot.lane.b32.xlu0 %v63, 15
  %v259 = vpop.permute.xlu0 %258
  %260 = vrot.lane.b32.xlu0 %v65, 15
  %v261 = vpop.permute.xlu0 %260
  %262 = vrot.lane.b32.xlu0 %v66, 15
  %v263 = vpop.permute.xlu0 %262
  %264 = vrot.lane.b32.xlu0 %v67, 15
  %v265 = vpop.permute.xlu0 %264
  %266 = vrot.lane.b32.xlu0 %v68, 15
  %v267 = vpop.permute.xlu0 %266
  %268 = vrot.lane.b32.xlu0 %v69, 15
  %v269 = vpop.permute.xlu0 %268
  %vm270 = vcmask 121856
  %v271 = vsel %vm270, %v251, %v253
  %v272 = vsel %vm270, %v253, %v255
  %v273 = vsel %vm270, %v255, %v257
  %v274 = vsel %vm270, %v257, %v259
  %v275 = vsel %vm270, %v261, %v263
  %v276 = vsel %vm270, %v263, %v265
  %v277 = vsel %vm270, %v265, %v267
  %v278 = vsel %vm270, %v267, %v269
  %v287 = vsel %vm246, %v271, 0.0
  %v288 = vsel %vm247, %v272, 0.0
  %v289 = vsel %vm248, %v273, 0.0
  %v290 = vsel %vm249, %v274, 0.0
  %v291 = vsel %vm246, %v275, 0.0
  %v292 = vsel %vm247, %v276, 0.0
  %v293 = vsel %vm248, %v277, 0.0
  %v294 = vsel %vm249, %v278, 0.0
  %v295 = vpack.c.bf16 %v291, %v287
  %v296 = vpack.c.bf16 %v292, %v288
  %v297 = vpack.c.bf16 %v293, %v289
  %v298 = vpack.c.bf16 %v294, %v290
  %299 = vst [vmem:[#allocation4 + $0x40] sm:$0xff] %v295
  %300 = vst [vmem:[#allocation4 + $0x48] sm:$0xff] %v296
  %301 = vst [vmem:[#allocation4 + $0x50] sm:$0xff] %v297
  %302 = vst [vmem:[#allocation4 + $0x58] sm:$0xff] %v298
  %v303 = vsel %vm37, 1, 0
  %v304 = vlaneseq
  %v305 = vshrl.u32 %v304, 7
  %v306 = vsub.s32 0, %v305
  %v307 = vrot.slane %v303, %v306
  %v308 = vlaneseq
  %v309 = vshrl.u32 %v308, 7
  %v310 = vsub.s32 1, %v309
  %v311 = vrot.slane %v303, %v310
  %v312 = vlaneseq
  %v313 = vshrl.u32 %v312, 7
  %v314 = vsub.s32 2, %v313
  %v315 = vrot.slane %v303, %v314
  %v316 = vlaneseq
  %v317 = vshrl.u32 %v316, 7
  %v318 = vsub.s32 3, %v317
  %v319 = vrot.slane %v303, %v318
  %vm320 = vcmp.eq.s32.totalorder %v307, 1
  %vm321 = vcmp.eq.s32.totalorder %v311, 1
  %vm322 = vcmp.eq.s32.totalorder %v315, 1
  %vm323 = vcmp.eq.s32.totalorder %v319, 1
  %324 = vrot.lane.b32.xlu0 %v59, 1
  %v325 = vpop.permute.xlu0 %324
  %326 = vrot.lane.b32.xlu0 %v60, 1
  %v327 = vpop.permute.xlu0 %326
  %328 = vrot.lane.b32.xlu0 %v61, 1
  %v329 = vpop.permute.xlu0 %328
  %330 = vrot.lane.b32.xlu0 %v62, 1
  %v331 = vpop.permute.xlu0 %330
  %332 = vrot.lane.b32.xlu0 %v63, 1
  %v333 = vpop.permute.xlu0 %332
  %334 = vrot.lane.b32.xlu0 %v65, 1
  %v335 = vpop.permute.xlu0 %334
  %336 = vrot.lane.b32.xlu0 %v66, 1
  %v337 = vpop.permute.xlu0 %336
  %338 = vrot.lane.b32.xlu0 %v67, 1
  %v339 = vpop.permute.xlu0 %338
  %340 = vrot.lane.b32.xlu0 %v68, 1
  %v341 = vpop.permute.xlu0 %340
  %342 = vrot.lane.b32.xlu0 %v69, 1
  %v343 = vpop.permute.xlu0 %342
  %vm344 = vcmask 7168
  %v345 = vsel %vm344, %v325, %v327
  %v346 = vsel %vm344, %v327, %v329
  %v347 = vsel %vm344, %v329, %v331
  %v348 = vsel %vm344, %v331, %v333
  %v349 = vsel %vm344, %v335, %v337
  %v350 = vsel %vm344, %v337, %v339
  %v351 = vsel %vm344, %v339, %v341
  %v352 = vsel %vm344, %v341, %v343
  %v361 = vsel %vm320, %v345, 0.0
  %v362 = vsel %vm321, %v346, 0.0
  %v363 = vsel %vm322, %v347, 0.0
  %v364 = vsel %vm323, %v348, 0.0
  %v365 = vsel %vm320, %v349, 0.0
  %v366 = vsel %vm321, %v350, 0.0
  %v367 = vsel %vm322, %v351, 0.0
  %v368 = vsel %vm323, %v352, 0.0
  %v369 = vpack.c.bf16 %v365, %v361
  %v370 = vpack.c.bf16 %v366, %v362
  %v371 = vpack.c.bf16 %v367, %v363
  %v372 = vpack.c.bf16 %v368, %v364
  %373 = vst [vmem:[#allocation4 + $0x60] sm:$0xff] %v369
  %374 = vst [vmem:[#allocation4 + $0x68] sm:$0xff] %v370
  %375 = vst [vmem:[#allocation4 + $0x70] sm:$0xff] %v371
  %376 = vst [vmem:[#allocation4 + $0x78] sm:$0xff] %v372
  %v377 = vpack.c.bf16 %v66, %v60
  %v378 = vpack.c.bf16 %v67, %v61
  %v379 = vpack.c.bf16 %v68, %v62
  %v380 = vpack.c.bf16 %v69, %v63
  %381 = vst [vmem:[#allocation4 + $0x80] sm:$0xff] %v377
  %382 = vst [vmem:[#allocation4 + $0x88] sm:$0xff] %v378
  %383 = vst [vmem:[#allocation4 + $0x90] sm:$0xff] %v379
  %384 = vst [vmem:[#allocation4 + $0x98] sm:$0xff] %v380
  %v385 = vsel %vm38, 1, 0
  %v386 = vlaneseq
  %v387 = vshrl.u32 %v386, 7
  %v388 = vsub.s32 0, %v387
  %v389 = vrot.slane %v385, %v388
  %v390 = vlaneseq
  %v391 = vshrl.u32 %v390, 7
  %v392 = vsub.s32 1, %v391
  %v393 = vrot.slane %v385, %v392
  %v394 = vlaneseq
  %v395 = vshrl.u32 %v394, 7
  %v396 = vsub.s32 2, %v395
  %v397 = vrot.slane %v385, %v396
  %v398 = vlaneseq
  %v399 = vshrl.u32 %v398, 7
  %v400 = vsub.s32 3, %v399
  %v401 = vrot.slane %v385, %v400
  %vm402 = vcmp.eq.s32.totalorder %v389, 1
  %vm403 = vcmp.eq.s32.totalorder %v393, 1
  %vm404 = vcmp.eq.s32.totalorder %v397, 1
  %vm405 = vcmp.eq.s32.totalorder %v401, 1
  %408 = vrot.lane.b32.xlu0 %v60, 127
  %v409 = vpop.permute.xlu0 %408
  %410 = vrot.lane.b32.xlu0 %v61, 127
  %v411 = vpop.permute.xlu0 %410
  %412 = vrot.lane.b32.xlu0 %v62, 127
  %v413 = vpop.permute.xlu0 %412
  %414 = vrot.lane.b32.xlu0 %v63, 127
  %v415 = vpop.permute.xlu0 %414
  %416 = vrot.lane.b32.xlu0 %v64, 127
  %v417 = vpop.permute.xlu0 %416
  %418 = vrot.lane.b32.xlu0 %v66, 127
  %v419 = vpop.permute.xlu0 %418
  %420 = vrot.lane.b32.xlu0 %v67, 127
  %v421 = vpop.permute.xlu0 %420
  %422 = vrot.lane.b32.xlu0 %v68, 127
  %v423 = vpop.permute.xlu0 %422
  %424 = vrot.lane.b32.xlu0 %v69, 127
  %v425 = vpop.permute.xlu0 %424
  %426 = vrot.lane.b32.xlu0 %v70, 127
  %v427 = vpop.permute.xlu0 %426
  %vm428 = vcmask 1039360
  %v429 = vsel %vm428, %v409, %v411
  %v430 = vsel %vm428, %v411, %v413
  %v431 = vsel %vm428, %v413, %v415
  %v432 = vsel %vm428, %v415, %v417
  %v433 = vsel %vm428, %v419, %v421
  %v434 = vsel %vm428, %v421, %v423
  %v435 = vsel %vm428, %v423, %v425
  %v436 = vsel %vm428, %v425, %v427
  %v445 = vsel %vm402, %v429, 0.0
  %v446 = vsel %vm403, %v430, 0.0
  %v447 = vsel %vm404, %v431, 0.0
  %v448 = vsel %vm405, %v432, 0.0
  %v449 = vsel %vm402, %v433, 0.0
  %v450 = vsel %vm403, %v434, 0.0
  %v451 = vsel %vm404, %v435, 0.0
  %v452 = vsel %vm405, %v436, 0.0
  %v453 = vpack.c.bf16 %v449, %v445
  %v454 = vpack.c.bf16 %v450, %v446
  %v455 = vpack.c.bf16 %v451, %v447
  %v456 = vpack.c.bf16 %v452, %v448
  %457 = vst [vmem:[#allocation4 + $0xa0] sm:$0xff] %v453
  %458 = vst [vmem:[#allocation4 + $0xa8] sm:$0xff] %v454
  %459 = vst [vmem:[#allocation4 + $0xb0] sm:$0xff] %v455
  %460 = vst [vmem:[#allocation4 + $0xb8] sm:$0xff] %v456
  %v461 = vsel %vm41, 1, 0
  %v462 = vlaneseq
  %v463 = vshrl.u32 %v462, 7
  %v464 = vsub.s32 0, %v463
  %v465 = vrot.slane %v461, %v464
  %v466 = vlaneseq
  %v467 = vshrl.u32 %v466, 7
  %v468 = vsub.s32 1, %v467
  %v469 = vrot.slane %v461, %v468
  %v470 = vlaneseq
  %v471 = vshrl.u32 %v470, 7
  %v472 = vsub.s32 2, %v471
  %v473 = vrot.slane %v461, %v472
  %v474 = vlaneseq
  %v475 = vshrl.u32 %v474, 7
  %v476 = vsub.s32 3, %v475
  %v477 = vrot.slane %v461, %v476
  %vm478 = vcmp.eq.s32.totalorder %v465, 1
  %vm479 = vcmp.eq.s32.totalorder %v469, 1
  %vm480 = vcmp.eq.s32.totalorder %v473, 1
  %vm481 = vcmp.eq.s32.totalorder %v477, 1
  %482 = vrot.lane.b32.xlu0 %v60, 113
  %v483 = vpop.permute.xlu0 %482
  %484 = vrot.lane.b32.xlu0 %v61, 113
  %v485 = vpop.permute.xlu0 %484
  %486 = vrot.lane.b32.xlu0 %v62, 113
  %v487 = vpop.permute.xlu0 %486
  %488 = vrot.lane.b32.xlu0 %v63, 113
  %v489 = vpop.permute.xlu0 %488
  %490 = vrot.lane.b32.xlu0 %v64, 113
  %v491 = vpop.permute.xlu0 %490
  %492 = vrot.lane.b32.xlu0 %v66, 113
  %v493 = vpop.permute.xlu0 %492
  %494 = vrot.lane.b32.xlu0 %v67, 113
  %v495 = vpop.permute.xlu0 %494
  %496 = vrot.lane.b32.xlu0 %v68, 113
  %v497 = vpop.permute.xlu0 %496
  %498 = vrot.lane.b32.xlu0 %v69, 113
  %v499 = vpop.permute.xlu0 %498
  %500 = vrot.lane.b32.xlu0 %v70, 113
  %v501 = vpop.permute.xlu0 %500
  %vm502 = vcmask 924672
  %v503 = vsel %vm502, %v483, %v485
  %v504 = vsel %vm502, %v485, %v487
  %v505 = vsel %vm502, %v487, %v489
  %v506 = vsel %vm502, %v489, %v491
  %v507 = vsel %vm502, %v493, %v495
  %v508 = vsel %vm502, %v495, %v497
  %v509 = vsel %vm502, %v497, %v499
  %v510 = vsel %vm502, %v499, %v501
  %v519 = vsel %vm478, %v503, 0.0
  %v520 = vsel %vm479, %v504, 0.0
  %v521 = vsel %vm480, %v505, 0.0
  %v522 = vsel %vm481, %v506, 0.0
  %v523 = vsel %vm478, %v507, 0.0
  %v524 = vsel %vm479, %v508, 0.0
  %v525 = vsel %vm480, %v509, 0.0
  %v526 = vsel %vm481, %v510, 0.0
  %v527 = vpack.c.bf16 %v523, %v519
  %v528 = vpack.c.bf16 %v524, %v520
  %v529 = vpack.c.bf16 %v525, %v521
  %v530 = vpack.c.bf16 %v526, %v522
  %531 = vst [vmem:[#allocation4 + $0xc0] sm:$0xff] %v527
  %532 = vst [vmem:[#allocation4 + $0xc8] sm:$0xff] %v528
  %533 = vst [vmem:[#allocation4 + $0xd0] sm:$0xff] %v529
  %534 = vst [vmem:[#allocation4 + $0xd8] sm:$0xff] %v530
  %v535 = vsel %vm36, 1, 0
  %v536 = vlaneseq
  %v537 = vshrl.u32 %v536, 7
  %v538 = vsub.s32 0, %v537
  %v539 = vrot.slane %v535, %v538
  %v540 = vlaneseq
  %v541 = vshrl.u32 %v540, 7
  %v542 = vsub.s32 1, %v541
  %v543 = vrot.slane %v535, %v542
  %v544 = vlaneseq
  %v545 = vshrl.u32 %v544, 7
  %v546 = vsub.s32 2, %v545
  %v547 = vrot.slane %v535, %v546
  %v548 = vlaneseq
  %v549 = vshrl.u32 %v548, 7
  %v550 = vsub.s32 3, %v549
  %v551 = vrot.slane %v535, %v550
  %vm552 = vcmp.eq.s32.totalorder %v539, 1
  %vm553 = vcmp.eq.s32.totalorder %v543, 1
  %vm554 = vcmp.eq.s32.totalorder %v547, 1
  %vm555 = vcmp.eq.s32.totalorder %v551, 1
  %556 = vrot.lane.b32.xlu0 %v60, 112
  %v557 = vpop.permute.xlu0 %556
  %558 = vrot.lane.b32.xlu0 %v61, 112
  %v559 = vpop.permute.xlu0 %558
  %560 = vrot.lane.b32.xlu0 %v62, 112
  %v561 = vpop.permute.xlu0 %560
  %562 = vrot.lane.b32.xlu0 %v63, 112
  %v563 = vpop.permute.xlu0 %562
  %564 = vrot.lane.b32.xlu0 %v64, 112
  %v565 = vpop.permute.xlu0 %564
  %566 = vrot.lane.b32.xlu0 %v66, 112
  %v567 = vpop.permute.xlu0 %566
  %568 = vrot.lane.b32.xlu0 %v67, 112
  %v569 = vpop.permute.xlu0 %568
  %570 = vrot.lane.b32.xlu0 %v68, 112
  %v571 = vpop.permute.xlu0 %570
  %572 = vrot.lane.b32.xlu0 %v69, 112
  %v573 = vpop.permute.xlu0 %572
  %574 = vrot.lane.b32.xlu0 %v70, 112
  %v575 = vpop.permute.xlu0 %574
  %vm576 = vcmask 916480
  %v577 = vsel %vm576, %v557, %v559
  %v578 = vsel %vm576, %v559, %v561
  %v579 = vsel %vm576, %v561, %v563
  %v580 = vsel %vm576, %v563, %v565
  %v581 = vsel %vm576, %v567, %v569
  %v582 = vsel %vm576, %v569, %v571
  %v583 = vsel %vm576, %v571, %v573
  %v584 = vsel %vm576, %v573, %v575
  %v593 = vsel %vm552, %v577, 0.0
  %v594 = vsel %vm553, %v578, 0.0
  %v595 = vsel %vm554, %v579, 0.0
  %v596 = vsel %vm555, %v580, 0.0
  %v597 = vsel %vm552, %v581, 0.0
  %v598 = vsel %vm553, %v582, 0.0
  %v599 = vsel %vm554, %v583, 0.0
  %v600 = vsel %vm555, %v584, 0.0
  %v601 = vpack.c.bf16 %v597, %v593
  %v602 = vpack.c.bf16 %v598, %v594
  %v603 = vpack.c.bf16 %v599, %v595
  %v604 = vpack.c.bf16 %v600, %v596
  %605 = vst [vmem:[#allocation4 + $0xe0] sm:$0xff] %v601
  %606 = vst [vmem:[#allocation4 + $0xe8] sm:$0xff] %v602
  %607 = vst [vmem:[#allocation4 + $0xf0] sm:$0xff] %v603
  %608 = vst [vmem:[#allocation4 + $0xf8] sm:$0xff] %v604
  %v609 = vsel %vm42, 1, 0
  %v610 = vlaneseq
  %v611 = vshrl.u32 %v610, 7
  %v612 = vsub.s32 0, %v611
  %v613 = vrot.slane %v609, %v612
  %v614 = vlaneseq
  %v615 = vshrl.u32 %v614, 7
  %v616 = vsub.s32 1, %v615
  %v617 = vrot.slane %v609, %v616
  %v618 = vlaneseq
  %v619 = vshrl.u32 %v618, 7
  %v620 = vsub.s32 2, %v619
  %v621 = vrot.slane %v609, %v620
  %v622 = vlaneseq
  %v623 = vshrl.u32 %v622, 7
  %v624 = vsub.s32 3, %v623
  %v625 = vrot.slane %v609, %v624
  %vm626 = vcmp.eq.s32.totalorder %v613, 1
  %vm627 = vcmp.eq.s32.totalorder %v617, 1
  %vm628 = vcmp.eq.s32.totalorder %v621, 1
  %vm629 = vcmp.eq.s32.totalorder %v625, 1
  %630 = vrot.lane.b32.xlu0 %v60, 111
  %v631 = vpop.permute.xlu0 %630
  %632 = vrot.lane.b32.xlu0 %v61, 111
  %v633 = vpop.permute.xlu0 %632
  %634 = vrot.lane.b32.xlu0 %v62, 111
  %v635 = vpop.permute.xlu0 %634
  %636 = vrot.lane.b32.xlu0 %v63, 111
  %v637 = vpop.permute.xlu0 %636
  %638 = vrot.lane.b32.xlu0 %v64, 111
  %v639 = vpop.permute.xlu0 %638
  %640 = vrot.lane.b32.xlu0 %v66, 111
  %v641 = vpop.permute.xlu0 %640
  %642 = vrot.lane.b32.xlu0 %v67, 111
  %v643 = vpop.permute.xlu0 %642
  %644 = vrot.lane.b32.xlu0 %v68, 111
  %v645 = vpop.permute.xlu0 %644
  %646 = vrot.lane.b32.xlu0 %v69, 111
  %v647 = vpop.permute.xlu0 %646
  %648 = vrot.lane.b32.xlu0 %v70, 111
  %v649 = vpop.permute.xlu0 %648
  %vm650 = vcmask 908288
  %v651 = vsel %vm650, %v631, %v633
  %v652 = vsel %vm650, %v633, %v635
  %v653 = vsel %vm650, %v635, %v637
  %v654 = vsel %vm650, %v637, %v639
  %v655 = vsel %vm650, %v641, %v643
  %v656 = vsel %vm650, %v643, %v645
  %v657 = vsel %vm650, %v645, %v647
  %v658 = vsel %vm650, %v647, %v649
  %v667 = vsel %vm626, %v651, 0.0
  %v668 = vsel %vm627, %v652, 0.0
  %v669 = vsel %vm628, %v653, 0.0
  %v670 = vsel %vm629, %v654, 0.0
  %v671 = vsel %vm626, %v655, 0.0
  %v672 = vsel %vm627, %v656, 0.0
  %v673 = vsel %vm628, %v657, 0.0
  %v674 = vsel %vm629, %v658, 0.0
  %v675 = vpack.c.bf16 %v671, %v667
  %v676 = vpack.c.bf16 %v672, %v668
  %v677 = vpack.c.bf16 %v673, %v669
  %v678 = vpack.c.bf16 %v674, %v670
  %679 = vst [vmem:[#allocation4 + $0x100] sm:$0xff] %v675
  %680 = vst [vmem:[#allocation4 + $0x108] sm:$0xff] %v676
  %681 = vst [vmem:[#allocation4 + $0x110] sm:$0xff] %v677
  %682 = vst [vmem:[#allocation4 + $0x118] sm:$0xff] %v678
  %v683 = vld [vmem:[%s3] sm:$0xff]
  %v684 = vld [vmem:[%s3 + $0x8] sm:$0xff]
  %v685 = vld [vmem:[#allocation4] sm:$0xff]
  %v686 = vld [vmem:[#allocation4 + $0x8] sm:$0xff]
  %v687 = vld [vmem:[#allocation4 + $0x10] sm:$0xff]
  %v688 = vld [vmem:[#allocation4 + $0x18] sm:$0xff]
  %v689 = vld [vmem:[#allocation4 + $0x20] sm:$0xff]
  %v690 = vld [vmem:[#allocation4 + $0x28] sm:$0xff]
  %v691 = vld [vmem:[#allocation4 + $0x30] sm:$0xff]
  %v692 = vld [vmem:[#allocation4 + $0x38] sm:$0xff]
  %v693 = vld [vmem:[#allocation4 + $0x40] sm:$0xff]
  %v694 = vld [vmem:[#allocation4 + $0x48] sm:$0xff]
  %v695 = vld [vmem:[#allocation4 + $0x50] sm:$0xff]
  %v696 = vld [vmem:[#allocation4 + $0x58] sm:$0xff]
  %v697 = vld [vmem:[#allocation4 + $0x60] sm:$0xff]
  %v698 = vld [vmem:[#allocation4 + $0x68] sm:$0xff]
  %v699 = vld [vmem:[#allocation4 + $0x70] sm:$0xff]
  %v700 = vld [vmem:[#allocation4 + $0x78] sm:$0xff]
  %v701 = vld [vmem:[#allocation4 + $0x80] sm:$0xff]
  %v702 = vld [vmem:[#allocation4 + $0x88] sm:$0xff]
  %v703 = vld [vmem:[#allocation4 + $0x90] sm:$0xff]
  %v704 = vld [vmem:[#allocation4 + $0x98] sm:$0xff]
  %v705 = vld [vmem:[#allocation4 + $0xa0] sm:$0xff]
  %v706 = vld [vmem:[#allocation4 + $0xa8] sm:$0xff]
  %v707 = vld [vmem:[#allocation4 + $0xb0] sm:$0xff]
  %v708 = vld [vmem:[#allocation4 + $0xb8] sm:$0xff]
  %v709 = vld [vmem:[#allocation4 + $0xc0] sm:$0xff]
  %v710 = vld [vmem:[#allocation4 + $0xc8] sm:$0xff]
  %v711 = vld [vmem:[#allocation4 + $0xd0] sm:$0xff]
  %v712 = vld [vmem:[#allocation4 + $0xd8] sm:$0xff]
  %v713 = vld [vmem:[#allocation4 + $0xe0] sm:$0xff]
  %v714 = vld [vmem:[#allocation4 + $0xe8] sm:$0xff]
  %v715 = vld [vmem:[#allocation4 + $0xf0] sm:$0xff]
  %v716 = vld [vmem:[#allocation4 + $0xf8] sm:$0xff]
  %v717 = vld [vmem:[#allocation4 + $0x100] sm:$0xff]
  %v718 = vld [vmem:[#allocation4 + $0x108] sm:$0xff]
  %v719 = vld [vmem:[#allocation4 + $0x110] sm:$0xff]
  %v720 = vld [vmem:[#allocation4 + $0x118] sm:$0xff]
  %v723 = vunpack.c.l.b16 %v683
  %v724 = vunpack.c.h.b16 %v683
  %v725 = vunpack.c.l.b16 %v684
  %v726 = vunpack.c.h.b16 %v684
  %v727 = vpack.c.b16 %v725, %v723
  %v728 = vpack.c.b16 %v726, %v724
  %v731 = vsel %vm196, %v728, 0
  %733 = vmatprep.subr.bf16.mxu0 %v686
  %734 = vmatpush1.bf16.msra.mxu0 %v685
  %735 = vmatprep.subr.bf16.mxu0 %v690
  %736 = vmatpush1.bf16.msra.mxu0 %v689
  %737 = vmatprep.subr.bf16.mxu0 %v694
  %738 = vmatpush1.bf16.msra.mxu0 %v693
  %739 = vmatprep.subr.bf16.mxu0 %v698
  %740 = vmatpush1.bf16.msra.mxu0 %v697
  %741 = vmatprep.subr.bf16.mxu0 %v702
  %742 = vmatpush1.bf16.msra.mxu0 %v701
  %743 = vmatprep.subr.bf16.mxu0 %v706
  %744 = vmatpush1.bf16.msra.mxu0 %v705
  %745 = vmatprep.subr.bf16.mxu0 %v710
  %746 = vmatpush1.bf16.msra.mxu0 %v709
  %747 = vmatprep.subr.bf16.mxu0 %v714
  %748 = vmatpush1.bf16.msra.mxu0 %v713
  %749 = vmatprep.subr.bf16.mxu0 %v718
  %750 = vmatpush1.bf16.msra.mxu0 %v717
  %751 = vmatprep.subr.bf16.mxu0 0
  %752 = vmatpush1.bf16.msra.mxu0 0
  %753 = vmatprep.subr.bf16.mxu0 0
  %754 = vmatpush1.bf16.msra.mxu0 0
  %755 = vmatprep.subr.bf16.mxu0 0
  %756 = vmatpush1.bf16.msra.mxu0 0
  %757 = vmatprep.subr.bf16.mxu0 0
  %758 = vmatpush1.bf16.msra.mxu0 0
  %759 = vmatprep.subr.bf16.mxu0 0
  %760 = vmatpush1.bf16.msra.mxu0 0
  %761 = vmatprep.subr.bf16.mxu0 0
  %762 = vmatpush1.bf16.msra.mxu0 0
  %763 = vmatprep.subr.bf16.mxu0 0
  %764 = vmatpush1.bf16.msra.mxu0 0
  %765 = vmatprep.mubr.bf16.mxu0 %v731
  %766 = vmatmul.mubr.bf16.gmra.mrb[0].mxu0 %v727
  %v767 = vpop.f32.mrb[0].mxu0
  %v768 = vadd.f32 0.0, %v767
  %v769 = vpop.f32.mrb[0].mxu0
  %v770 = vadd.f32 0.0, %v769
  %v771 = vpop.f32.mrb[0].mxu0
  %v772 = vadd.f32 0.0, %v771
  %v773 = vpop.f32.mrb[0].mxu0
  %v774 = vadd.f32 0.0, %v773
  %775 = vdwg.mxu0
  %776 = vmatprep.subr.bf16.mxu0 %v688
  %777 = vmatpush1.bf16.msra.mxu0 %v687
  %778 = vmatprep.subr.bf16.mxu0 %v692
  %779 = vmatpush1.bf16.msra.mxu0 %v691
  %780 = vmatprep.subr.bf16.mxu0 %v696
  %781 = vmatpush1.bf16.msra.mxu0 %v695
  %782 = vmatprep.subr.bf16.mxu0 %v700
  %783 = vmatpush1.bf16.msra.mxu0 %v699
  %784 = vmatprep.subr.bf16.mxu0 %v704
  %785 = vmatpush1.bf16.msra.mxu0 %v703
  %786 = vmatprep.subr.bf16.mxu0 %v708
  %787 = vmatpush1.bf16.msra.mxu0 %v707
  %788 = vmatprep.subr.bf16.mxu0 %v712
  %789 = vmatpush1.bf16.msra.mxu0 %v711
  %790 = vmatprep.subr.bf16.mxu0 %v716
  %791 = vmatpush1.bf16.msra.mxu0 %v715
  %792 = vmatprep.subr.bf16.mxu0 %v720
  %793 = vmatpush1.bf16.msra.mxu0 %v719
  %794 = vmatprep.subr.bf16.mxu0 0
  %795 = vmatpush1.bf16.msra.mxu0 0
  %796 = vmatprep.subr.bf16.mxu0 0
  %797 = vmatpush1.bf16.msra.mxu0 0
  %798 = vmatprep.subr.bf16.mxu0 0
  %799 = vmatpush1.bf16.msra.mxu0 0
  %800 = vmatprep.subr.bf16.mxu0 0
  %801 = vmatpush1.bf16.msra.mxu0 0
  %802 = vmatprep.subr.bf16.mxu0 0
  %803 = vmatpush1.bf16.msra.mxu0 0
  %804 = vmatprep.subr.bf16.mxu0 0
  %805 = vmatpush1.bf16.msra.mxu0 0
  %806 = vmatprep.subr.bf16.mxu0 0
  %807 = vmatpush1.bf16.msra.mxu0 0
  %808 = vmatprep.mubr.bf16.mxu0 %v731
  %809 = vmatmul.mubr.bf16.gmra.mrb[0].mxu0 %v727
  %v810 = vpop.f32.mrb[0].mxu0
  %v811 = vadd.f32 0.0, %v810
  %v812 = vpop.f32.mrb[0].mxu0
  %v813 = vadd.f32 0.0, %v812
  %v814 = vpop.f32.mrb[0].mxu0
  %v815 = vadd.f32 0.0, %v814
  %v816 = vpop.f32.mrb[0].mxu0
  %v817 = vadd.f32 0.0, %v816
  %818 = vdwg.mxu0
  %v819 = vld [vmem:[%s4] sm:$0xff]
  %v820 = vld [vmem:[%s4 + $0x8] sm:$0xff]
  %v821 = vld [vmem:[%s5] sm:$0xff]
  %v822 = vld [vmem:[%s5 + $0x8] sm:$0xff]
  %v823 = vadd.f32 %v768, %v770
  %v824 = vadd.f32 %v823, %v811
  %v825 = vadd.f32 %v824, %v813
  %826 = vadd.xlane.f32.xlu0 %v825
  %v827 = vpop.xlane.xlu0 %826
  %v828 = vadd.f32 %v772, %v774
  %v829 = vadd.f32 %v828, %v815
  %v830 = vadd.f32 %v829, %v817
  %831 = vadd.xlane.f32.xlu0 %v830
  %v832 = vpop.xlane.xlu0 %831
  %v833 = vrcp.pop 512.0
  %v834 = vmul.f32 %v827, %v833
  %v835 = vmul.f32 %v832, %v833
  %v836 = vsub.f32 %v768, %v834
  %v837 = vsub.f32 %v770, %v834
  %v838 = vsub.f32 %v811, %v834
  %v839 = vsub.f32 %v813, %v834
  %v840 = vsub.f32 %v772, %v835
  %v841 = vsub.f32 %v774, %v835
  %v842 = vsub.f32 %v815, %v835
  %v843 = vsub.f32 %v817, %v835
  %v844 = vmul.f32 %v836, %v836
  %v845 = vmul.f32 %v837, %v837
  %v846 = vmul.f32 %v838, %v838
  %v847 = vmul.f32 %v839, %v839
  %v848 = vmul.f32 %v840, %v840
  %v849 = vmul.f32 %v841, %v841
  %v850 = vmul.f32 %v842, %v842
  %v851 = vmul.f32 %v843, %v843
  %v852 = vadd.f32 %v844, %v845
  %v853 = vadd.f32 %v852, %v846
  %v854 = vadd.f32 %v853, %v847
  %855 = vadd.xlane.f32.xlu0 %v854
  %v856 = vpop.xlane.xlu0 %855
  %v857 = vadd.f32 %v848, %v849
  %v858 = vadd.f32 %v857, %v850
  %v859 = vadd.f32 %v858, %v851
  %860 = vadd.xlane.f32.xlu0 %v859
  %v861 = vpop.xlane.xlu0 %860
  %v862 = vmul.f32 %v856, %v833
  %v863 = vmul.f32 %v861, %v833
  %v864 = vadd.f32 %v862, 1e-05
  %v865 = vadd.f32 %v863, 1e-05
  %v866 = vrsqrt.pop %v864
  %v867 = vrsqrt.pop %v865
  %v868 = vmul.f32 %v836, %v866
  %v869 = vmul.f32 %v837, %v866
  %v870 = vmul.f32 %v838, %v866
  %v871 = vmul.f32 %v839, %v866
  %v872 = vmul.f32 %v840, %v867
  %v873 = vmul.f32 %v841, %v867
  %v874 = vmul.f32 %v842, %v867
  %v875 = vmul.f32 %v843, %v867
  %877 = vset.pattern.permute.xlu0 0
  %878 = vperm.xlu0 %877, %v819
  %v879 = vpop.permute.xlu0 %878
  %882 = vset.pattern.permute.xlu0 0
  %883 = vperm.xlu0 %882, %v820
  %v884 = vpop.permute.xlu0 %883
  %v886 = vmul.f32 %v868, %v879
  %v887 = vmul.f32 %v869, %v879
  %v888 = vmul.f32 %v870, %v879
  %v889 = vmul.f32 %v871, %v879
  %v890 = vmul.f32 %v872, %v884
  %v891 = vmul.f32 %v873, %v884
  %v892 = vmul.f32 %v874, %v884
  %v893 = vmul.f32 %v875, %v884
  %895 = vset.pattern.permute.xlu0 0
  %896 = vperm.xlu0 %895, %v821
  %v897 = vpop.permute.xlu0 %896
  %900 = vset.pattern.permute.xlu0 0
  %901 = vperm.xlu0 %900, %v822
  %v902 = vpop.permute.xlu0 %901
  %v904 = vadd.f32 %v886, %v897
  %v905 = vadd.f32 %v887, %v897
  %v906 = vadd.f32 %v888, %v897
  %v907 = vadd.f32 %v889, %v897
  %v908 = vadd.f32 %v890, %v902
  %v909 = vadd.f32 %v891, %v902
  %v910 = vadd.f32 %v892, %v902
  %v911 = vadd.f32 %v893, %v902
  %v912 = vmax.f32 %v904, 0.0
  %v913 = vmax.f32 %v905, 0.0
  %v914 = vmax.f32 %v906, 0.0
  %v915 = vmax.f32 %v907, 0.0
  %v916 = vmax.f32 %v908, 0.0
  %v917 = vmax.f32 %v909, 0.0
  %v918 = vmax.f32 %v910, 0.0
  %v919 = vmax.f32 %v911, 0.0
  %920 = vst [vmem:[#allocation3 + $0x8] sm:$0xff] %v912
  %921 = vst [vmem:[#allocation3 + $0x10] sm:$0xff] %v913
  %922 = vst [vmem:[#allocation3 + $0x18] sm:$0xff] %v914
  %923 = vst [vmem:[#allocation3 + $0x20] sm:$0xff] %v915
  %924 = vst [vmem:[#allocation3 + $0x38] sm:$0xff] %v916
  %925 = vst [vmem:[#allocation3 + $0x40] sm:$0xff] %v917
  %926 = vst [vmem:[#allocation3 + $0x48] sm:$0xff] %v918
  %927 = vst [vmem:[#allocation3 + $0x50] sm:$0xff] %v919
  %v928 = vld [vmem:[#allocation3] sm:$0xff]
  %v929 = vld [vmem:[#allocation3 + $0x8] sm:$0xff]
  %v930 = vld [vmem:[#allocation3 + $0x10] sm:$0xff]
  %v931 = vld [vmem:[#allocation3 + $0x18] sm:$0xff]
  %v932 = vld [vmem:[#allocation3 + $0x20] sm:$0xff]
  %v933 = vld [vmem:[#allocation3 + $0x28] sm:$0xff]
  %v934 = vld [vmem:[#allocation3 + $0x30] sm:$0xff]
  %v935 = vld [vmem:[#allocation3 + $0x38] sm:$0xff]
  %v936 = vld [vmem:[#allocation3 + $0x40] sm:$0xff]
  %v937 = vld [vmem:[#allocation3 + $0x48] sm:$0xff]
  %v938 = vld [vmem:[#allocation3 + $0x50] sm:$0xff]
  %v939 = vld [vmem:[#allocation3 + $0x58] sm:$0xff]
  %950 = vrot.lane.b32.xlu0 %v928, 17
  %v951 = vpop.permute.xlu0 %950
  %952 = vrot.lane.b32.xlu0 %v929, 17
  %v953 = vpop.permute.xlu0 %952
  %954 = vrot.lane.b32.xlu0 %v930, 17
  %v955 = vpop.permute.xlu0 %954
  %956 = vrot.lane.b32.xlu0 %v931, 17
  %v957 = vpop.permute.xlu0 %956
  %958 = vrot.lane.b32.xlu0 %v932, 17
  %v959 = vpop.permute.xlu0 %958
  %960 = vrot.lane.b32.xlu0 %v934, 17
  %v961 = vpop.permute.xlu0 %960
  %962 = vrot.lane.b32.xlu0 %v935, 17
  %v963 = vpop.permute.xlu0 %962
  %964 = vrot.lane.b32.xlu0 %v936, 17
  %v965 = vpop.permute.xlu0 %964
  %966 = vrot.lane.b32.xlu0 %v937, 17
  %v967 = vpop.permute.xlu0 %966
  %968 = vrot.lane.b32.xlu0 %v938, 17
  %v969 = vpop.permute.xlu0 %968
  %v970 = vsel %vm122, %v951, %v953
  %v971 = vsel %vm122, %v953, %v955
  %v972 = vsel %vm122, %v955, %v957
  %v973 = vsel %vm122, %v957, %v959
  %v974 = vsel %vm122, %v961, %v963
  %v975 = vsel %vm122, %v963, %v965
  %v976 = vsel %vm122, %v965, %v967
  %v977 = vsel %vm122, %v967, %v969
  %v986 = vsel %vm88, %v970, 0.0
  %v987 = vsel %vm89, %v971, 0.0
  %v988 = vsel %vm90, %v972, 0.0
  %v989 = vsel %vm91, %v973, 0.0
  %v990 = vsel %vm88, %v974, 0.0
  %v991 = vsel %vm89, %v975, 0.0
  %v992 = vsel %vm90, %v976, 0.0
  %v993 = vsel %vm91, %v977, 0.0
  %v994 = vpack.c.bf16 %v990, %v986
  %v995 = vpack.c.bf16 %v991, %v987
  %v996 = vpack.c.bf16 %v992, %v988
  %v997 = vpack.c.bf16 %v993, %v989
  %998 = vst [vmem:[#allocation4] sm:$0xff] %v994
  %999 = vst [vmem:[#allocation4 + $0x8] sm:$0xff] %v995
  %1000 = vst [vmem:[#allocation4 + $0x10] sm:$0xff] %v996
  %1001 = vst [vmem:[#allocation4 + $0x18] sm:$0xff] %v997
  %1002 = vrot.lane.b32.xlu0 %v928, 16
  %v1003 = vpop.permute.xlu0 %1002
  %1004 = vrot.lane.b32.xlu0 %v929, 16
  %v1005 = vpop.permute.xlu0 %1004
  %1006 = vrot.lane.b32.xlu0 %v930, 16
  %v1007 = vpop.permute.xlu0 %1006
  %1008 = vrot.lane.b32.xlu0 %v931, 16
  %v1009 = vpop.permute.xlu0 %1008
  %1010 = vrot.lane.b32.xlu0 %v932, 16
  %v1011 = vpop.permute.xlu0 %1010
  %1012 = vrot.lane.b32.xlu0 %v934, 16
  %v1013 = vpop.permute.xlu0 %1012
  %1014 = vrot.lane.b32.xlu0 %v935, 16
  %v1015 = vpop.permute.xlu0 %1014
  %1016 = vrot.lane.b32.xlu0 %v936, 16
  %v1017 = vpop.permute.xlu0 %1016
  %1018 = vrot.lane.b32.xlu0 %v937, 16
  %v1019 = vpop.permute.xlu0 %1018
  %1020 = vrot.lane.b32.xlu0 %v938, 16
  %v1021 = vpop.permute.xlu0 %1020
  %v1022 = vsel %vm196, %v1003, %v1005
  %v1023 = vsel %vm196, %v1005, %v1007
  %v1024 = vsel %vm196, %v1007, %v1009
  %v1025 = vsel %vm196, %v1009, %v1011
  %v1026 = vsel %vm196, %v1013, %v1015
  %v1027 = vsel %vm196, %v1015, %v1017
  %v1028 = vsel %vm196, %v1017, %v1019
  %v1029 = vsel %vm196, %v1019, %v1021
  %v1038 = vsel %vm172, %v1022, 0.0
  %v1039 = vsel %vm173, %v1023, 0.0
  %v1040 = vsel %vm174, %v1024, 0.0
  %v1041 = vsel %vm175, %v1025, 0.0
  %v1042 = vsel %vm172, %v1026, 0.0
  %v1043 = vsel %vm173, %v1027, 0.0
  %v1044 = vsel %vm174, %v1028, 0.0
  %v1045 = vsel %vm175, %v1029, 0.0
  %v1046 = vpack.c.bf16 %v1042, %v1038
  %v1047 = vpack.c.bf16 %v1043, %v1039
  %v1048 = vpack.c.bf16 %v1044, %v1040
  %v1049 = vpack.c.bf16 %v1045, %v1041
  %1050 = vst [vmem:[#allocation4 + $0x20] sm:$0xff] %v1046
  %1051 = vst [vmem:[#allocation4 + $0x28] sm:$0xff] %v1047
  %1052 = vst [vmem:[#allocation4 + $0x30] sm:$0xff] %v1048
  %1053 = vst [vmem:[#allocation4 + $0x38] sm:$0xff] %v1049
  %1054 = vrot.lane.b32.xlu0 %v928, 15
  %v1055 = vpop.permute.xlu0 %1054
  %1056 = vrot.lane.b32.xlu0 %v929, 15
  %v1057 = vpop.permute.xlu0 %1056
  %1058 = vrot.lane.b32.xlu0 %v930, 15
  %v1059 = vpop.permute.xlu0 %1058
  %1060 = vrot.lane.b32.xlu0 %v931, 15
  %v1061 = vpop.permute.xlu0 %1060
  %1062 = vrot.lane.b32.xlu0 %v932, 15
  %v1063 = vpop.permute.xlu0 %1062
  %1064 = vrot.lane.b32.xlu0 %v934, 15
  %v1065 = vpop.permute.xlu0 %1064
  %1066 = vrot.lane.b32.xlu0 %v935, 15
  %v1067 = vpop.permute.xlu0 %1066
  %1068 = vrot.lane.b32.xlu0 %v936, 15
  %v1069 = vpop.permute.xlu0 %1068
  %1070 = vrot.lane.b32.xlu0 %v937, 15
  %v1071 = vpop.permute.xlu0 %1070
  %1072 = vrot.lane.b32.xlu0 %v938, 15
  %v1073 = vpop.permute.xlu0 %1072
  %v1074 = vsel %vm270, %v1055, %v1057
  %v1075 = vsel %vm270, %v1057, %v1059
  %v1076 = vsel %vm270, %v1059, %v1061
  %v1077 = vsel %vm270, %v1061, %v1063
  %v1078 = vsel %vm270, %v1065, %v1067
  %v1079 = vsel %vm270, %v1067, %v1069
  %v1080 = vsel %vm270, %v1069, %v1071
  %v1081 = vsel %vm270, %v1071, %v1073
  %v1090 = vsel %vm246, %v1074, 0.0
  %v1091 = vsel %vm247, %v1075, 0.0
  %v1092 = vsel %vm248, %v1076, 0.0
  %v1093 = vsel %vm249, %v1077, 0.0
  %v1094 = vsel %vm246, %v1078, 0.0
  %v1095 = vsel %vm247, %v1079, 0.0
  %v1096 = vsel %vm248, %v1080, 0.0
  %v1097 = vsel %vm249, %v1081, 0.0
  %v1098 = vpack.c.bf16 %v1094, %v1090
  %v1099 = vpack.c.bf16 %v1095, %v1091
  %v1100 = vpack.c.bf16 %v1096, %v1092
  %v1101 = vpack.c.bf16 %v1097, %v1093
  %1102 = vst [vmem:[#allocation4 + $0x40] sm:$0xff] %v1098
  %1103 = vst [vmem:[#allocation4 + $0x48] sm:$0xff] %v1099
  %1104 = vst [vmem:[#allocation4 + $0x50] sm:$0xff] %v1100
  %1105 = vst [vmem:[#allocation4 + $0x58] sm:$0xff] %v1101
  %1106 = vrot.lane.b32.xlu0 %v928, 1
  %v1107 = vpop.permute.xlu0 %1106
  %1108 = vrot.lane.b32.xlu0 %v929, 1
  %v1109 = vpop.permute.xlu0 %1108
  %1110 = vrot.lane.b32.xlu0 %v930, 1
  %v1111 = vpop.permute.xlu0 %1110
  %1112 = vrot.lane.b32.xlu0 %v931, 1
  %v1113 = vpop.permute.xlu0 %1112
  %1114 = vrot.lane.b32.xlu0 %v932, 1
  %v1115 = vpop.permute.xlu0 %1114
  %1116 = vrot.lane.b32.xlu0 %v934, 1
  %v1117 = vpop.permute.xlu0 %1116
  %1118 = vrot.lane.b32.xlu0 %v935, 1
  %v1119 = vpop.permute.xlu0 %1118
  %1120 = vrot.lane.b32.xlu0 %v936, 1
  %v1121 = vpop.permute.xlu0 %1120
  %1122 = vrot.lane.b32.xlu0 %v937, 1
  %v1123 = vpop.permute.xlu0 %1122
  %1124 = vrot.lane.b32.xlu0 %v938, 1
  %v1125 = vpop.permute.xlu0 %1124
  %v1126 = vsel %vm344, %v1107, %v1109
  %v1127 = vsel %vm344, %v1109, %v1111
  %v1128 = vsel %vm344, %v1111, %v1113
  %v1129 = vsel %vm344, %v1113, %v1115
  %v1130 = vsel %vm344, %v1117, %v1119
  %v1131 = vsel %vm344, %v1119, %v1121
  %v1132 = vsel %vm344, %v1121, %v1123
  %v1133 = vsel %vm344, %v1123, %v1125
  %v1142 = vsel %vm320, %v1126, 0.0
  %v1143 = vsel %vm321, %v1127, 0.0
  %v1144 = vsel %vm322, %v1128, 0.0
  %v1145 = vsel %vm323, %v1129, 0.0
  %v1146 = vsel %vm320, %v1130, 0.0
  %v1147 = vsel %vm321, %v1131, 0.0
  %v1148 = vsel %vm322, %v1132, 0.0
  %v1149 = vsel %vm323, %v1133, 0.0
  %v1150 = vpack.c.bf16 %v1146, %v1142
  %v1151 = vpack.c.bf16 %v1147, %v1143
  %v1152 = vpack.c.bf16 %v1148, %v1144
  %v1153 = vpack.c.bf16 %v1149, %v1145
  %1154 = vst [vmem:[#allocation4 + $0x60] sm:$0xff] %v1150
  %1155 = vst [vmem:[#allocation4 + $0x68] sm:$0xff] %v1151
  %1156 = vst [vmem:[#allocation4 + $0x70] sm:$0xff] %v1152
  %1157 = vst [vmem:[#allocation4 + $0x78] sm:$0xff] %v1153
  %v1158 = vpack.c.bf16 %v935, %v929
  %v1159 = vpack.c.bf16 %v936, %v930
  %v1160 = vpack.c.bf16 %v937, %v931
  %v1161 = vpack.c.bf16 %v938, %v932
  %1162 = vst [vmem:[#allocation4 + $0x80] sm:$0xff] %v1158
  %1163 = vst [vmem:[#allocation4 + $0x88] sm:$0xff] %v1159
  %1164 = vst [vmem:[#allocation4 + $0x90] sm:$0xff] %v1160
  %1165 = vst [vmem:[#allocation4 + $0x98] sm:$0xff] %v1161
  %1168 = vrot.lane.b32.xlu0 %v929, 127
  %v1169 = vpop.permute.xlu0 %1168
  %1170 = vrot.lane.b32.xlu0 %v930, 127
  %v1171 = vpop.permute.xlu0 %1170
  %1172 = vrot.lane.b32.xlu0 %v931, 127
  %v1173 = vpop.permute.xlu0 %1172
  %1174 = vrot.lane.b32.xlu0 %v932, 127
  %v1175 = vpop.permute.xlu0 %1174
  %1176 = vrot.lane.b32.xlu0 %v933, 127
  %v1177 = vpop.permute.xlu0 %1176
  %1178 = vrot.lane.b32.xlu0 %v935, 127
  %v1179 = vpop.permute.xlu0 %1178
  %1180 = vrot.lane.b32.xlu0 %v936, 127
  %v1181 = vpop.permute.xlu0 %1180
  %1182 = vrot.lane.b32.xlu0 %v937, 127
  %v1183 = vpop.permute.xlu0 %1182
  %1184 = vrot.lane.b32.xlu0 %v938, 127
  %v1185 = vpop.permute.xlu0 %1184
  %1186 = vrot.lane.b32.xlu0 %v939, 127
  %v1187 = vpop.permute.xlu0 %1186
  %v1188 = vsel %vm428, %v1169, %v1171
  %v1189 = vsel %vm428, %v1171, %v1173
  %v1190 = vsel %vm428, %v1173, %v1175
  %v1191 = vsel %vm428, %v1175, %v1177
  %v1192 = vsel %vm428, %v1179, %v1181
  %v1193 = vsel %vm428, %v1181, %v1183
  %v1194 = vsel %vm428, %v1183, %v1185
  %v1195 = vsel %vm428, %v1185, %v1187
  %v1204 = vsel %vm402, %v1188, 0.0
  %v1205 = vsel %vm403, %v1189, 0.0
  %v1206 = vsel %vm404, %v1190, 0.0
  %v1207 = vsel %vm405, %v1191, 0.0
  %v1208 = vsel %vm402, %v1192, 0.0
  %v1209 = vsel %vm403, %v1193, 0.0
  %v1210 = vsel %vm404, %v1194, 0.0
  %v1211 = vsel %vm405, %v1195, 0.0
  %v1212 = vpack.c.bf16 %v1208, %v1204
  %v1213 = vpack.c.bf16 %v1209, %v1205
  %v1214 = vpack.c.bf16 %v1210, %v1206
  %v1215 = vpack.c.bf16 %v1211, %v1207
  %1216 = vst [vmem:[#allocation4 + $0xa0] sm:$0xff] %v1212
  %1217 = vst [vmem:[#allocation4 + $0xa8] sm:$0xff] %v1213
  %1218 = vst [vmem:[#allocation4 + $0xb0] sm:$0xff] %v1214
  %1219 = vst [vmem:[#allocation4 + $0xb8] sm:$0xff] %v1215
  %1220 = vrot.lane.b32.xlu0 %v929, 113
  %v1221 = vpop.permute.xlu0 %1220
  %1222 = vrot.lane.b32.xlu0 %v930, 113
  %v1223 = vpop.permute.xlu0 %1222
  %1224 = vrot.lane.b32.xlu0 %v931, 113
  %v1225 = vpop.permute.xlu0 %1224
  %1226 = vrot.lane.b32.xlu0 %v932, 113
  %v1227 = vpop.permute.xlu0 %1226
  %1228 = vrot.lane.b32.xlu0 %v933, 113
  %v1229 = vpop.permute.xlu0 %1228
  %1230 = vrot.lane.b32.xlu0 %v935, 113
  %v1231 = vpop.permute.xlu0 %1230
  %1232 = vrot.lane.b32.xlu0 %v936, 113
  %v1233 = vpop.permute.xlu0 %1232
  %1234 = vrot.lane.b32.xlu0 %v937, 113
  %v1235 = vpop.permute.xlu0 %1234
  %1236 = vrot.lane.b32.xlu0 %v938, 113
  %v1237 = vpop.permute.xlu0 %1236
  %1238 = vrot.lane.b32.xlu0 %v939, 113
  %v1239 = vpop.permute.xlu0 %1238
  %v1240 = vsel %vm502, %v1221, %v1223
  %v1241 = vsel %vm502, %v1223, %v1225
  %v1242 = vsel %vm502, %v1225, %v1227
  %v1243 = vsel %vm502, %v1227, %v1229
  %v1244 = vsel %vm502, %v1231, %v1233
  %v1245 = vsel %vm502, %v1233, %v1235
  %v1246 = vsel %vm502, %v1235, %v1237
  %v1247 = vsel %vm502, %v1237, %v1239
  %v1256 = vsel %vm478, %v1240, 0.0
  %v1257 = vsel %vm479, %v1241, 0.0
  %v1258 = vsel %vm480, %v1242, 0.0
  %v1259 = vsel %vm481, %v1243, 0.0
  %v1260 = vsel %vm478, %v1244, 0.0
  %v1261 = vsel %vm479, %v1245, 0.0
  %v1262 = vsel %vm480, %v1246, 0.0
  %v1263 = vsel %vm481, %v1247, 0.0
  %v1264 = vpack.c.bf16 %v1260, %v1256
  %v1265 = vpack.c.bf16 %v1261, %v1257
  %v1266 = vpack.c.bf16 %v1262, %v1258
  %v1267 = vpack.c.bf16 %v1263, %v1259
  %1268 = vst [vmem:[#allocation4 + $0xc0] sm:$0xff] %v1264
  %1269 = vst [vmem:[#allocation4 + $0xc8] sm:$0xff] %v1265
  %1270 = vst [vmem:[#allocation4 + $0xd0] sm:$0xff] %v1266
  %1271 = vst [vmem:[#allocation4 + $0xd8] sm:$0xff] %v1267
  %1272 = vrot.lane.b32.xlu0 %v929, 112
  %v1273 = vpop.permute.xlu0 %1272
  %1274 = vrot.lane.b32.xlu0 %v930, 112
  %v1275 = vpop.permute.xlu0 %1274
  %1276 = vrot.lane.b32.xlu0 %v931, 112
  %v1277 = vpop.permute.xlu0 %1276
  %1278 = vrot.lane.b32.xlu0 %v932, 112
  %v1279 = vpop.permute.xlu0 %1278
  %1280 = vrot.lane.b32.xlu0 %v933, 112
  %v1281 = vpop.permute.xlu0 %1280
  %1282 = vrot.lane.b32.xlu0 %v935, 112
  %v1283 = vpop.permute.xlu0 %1282
  %1284 = vrot.lane.b32.xlu0 %v936, 112
  %v1285 = vpop.permute.xlu0 %1284
  %1286 = vrot.lane.b32.xlu0 %v937, 112
  %v1287 = vpop.permute.xlu0 %1286
  %1288 = vrot.lane.b32.xlu0 %v938, 112
  %v1289 = vpop.permute.xlu0 %1288
  %1290 = vrot.lane.b32.xlu0 %v939, 112
  %v1291 = vpop.permute.xlu0 %1290
  %v1292 = vsel %vm576, %v1273, %v1275
  %v1293 = vsel %vm576, %v1275, %v1277
  %v1294 = vsel %vm576, %v1277, %v1279
  %v1295 = vsel %vm576, %v1279, %v1281
  %v1296 = vsel %vm576, %v1283, %v1285
  %v1297 = vsel %vm576, %v1285, %v1287
  %v1298 = vsel %vm576, %v1287, %v1289
  %v1299 = vsel %vm576, %v1289, %v1291
  %v1308 = vsel %vm552, %v1292, 0.0
  %v1309 = vsel %vm553, %v1293, 0.0
  %v1310 = vsel %vm554, %v1294, 0.0
  %v1311 = vsel %vm555, %v1295, 0.0
  %v1312 = vsel %vm552, %v1296, 0.0
  %v1313 = vsel %vm553, %v1297, 0.0
  %v1314 = vsel %vm554, %v1298, 0.0
  %v1315 = vsel %vm555, %v1299, 0.0
  %v1316 = vpack.c.bf16 %v1312, %v1308
  %v1317 = vpack.c.bf16 %v1313, %v1309
  %v1318 = vpack.c.bf16 %v1314, %v1310
  %v1319 = vpack.c.bf16 %v1315, %v1311
  %1320 = vst [vmem:[#allocation4 + $0xe0] sm:$0xff] %v1316
  %1321 = vst [vmem:[#allocation4 + $0xe8] sm:$0xff] %v1317
  %1322 = vst [vmem:[#allocation4 + $0xf0] sm:$0xff] %v1318
  %1323 = vst [vmem:[#allocation4 + $0xf8] sm:$0xff] %v1319
  %1324 = vrot.lane.b32.xlu0 %v929, 111
  %v1325 = vpop.permute.xlu0 %1324
  %1326 = vrot.lane.b32.xlu0 %v930, 111
  %v1327 = vpop.permute.xlu0 %1326
  %1328 = vrot.lane.b32.xlu0 %v931, 111
  %v1329 = vpop.permute.xlu0 %1328
  %1330 = vrot.lane.b32.xlu0 %v932, 111
  %v1331 = vpop.permute.xlu0 %1330
  %1332 = vrot.lane.b32.xlu0 %v933, 111
  %v1333 = vpop.permute.xlu0 %1332
  %1334 = vrot.lane.b32.xlu0 %v935, 111
  %v1335 = vpop.permute.xlu0 %1334
  %1336 = vrot.lane.b32.xlu0 %v936, 111
  %v1337 = vpop.permute.xlu0 %1336
  %1338 = vrot.lane.b32.xlu0 %v937, 111
  %v1339 = vpop.permute.xlu0 %1338
  %1340 = vrot.lane.b32.xlu0 %v938, 111
  %v1341 = vpop.permute.xlu0 %1340
  %1342 = vrot.lane.b32.xlu0 %v939, 111
  %v1343 = vpop.permute.xlu0 %1342
  %v1344 = vsel %vm650, %v1325, %v1327
  %v1345 = vsel %vm650, %v1327, %v1329
  %v1346 = vsel %vm650, %v1329, %v1331
  %v1347 = vsel %vm650, %v1331, %v1333
  %v1348 = vsel %vm650, %v1335, %v1337
  %v1349 = vsel %vm650, %v1337, %v1339
  %v1350 = vsel %vm650, %v1339, %v1341
  %v1351 = vsel %vm650, %v1341, %v1343
  %v1360 = vsel %vm626, %v1344, 0.0
  %v1361 = vsel %vm627, %v1345, 0.0
  %v1362 = vsel %vm628, %v1346, 0.0
  %v1363 = vsel %vm629, %v1347, 0.0
  %v1364 = vsel %vm626, %v1348, 0.0
  %v1365 = vsel %vm627, %v1349, 0.0
  %v1366 = vsel %vm628, %v1350, 0.0
  %v1367 = vsel %vm629, %v1351, 0.0
  %v1368 = vpack.c.bf16 %v1364, %v1360
  %v1369 = vpack.c.bf16 %v1365, %v1361
  %v1370 = vpack.c.bf16 %v1366, %v1362
  %v1371 = vpack.c.bf16 %v1367, %v1363
  %1372 = vst [vmem:[#allocation4 + $0x100] sm:$0xff] %v1368
  %1373 = vst [vmem:[#allocation4 + $0x108] sm:$0xff] %v1369
  %1374 = vst [vmem:[#allocation4 + $0x110] sm:$0xff] %v1370
  %1375 = vst [vmem:[#allocation4 + $0x118] sm:$0xff] %v1371
  %v1376 = vld [vmem:[%s6] sm:$0xff]
  %v1377 = vld [vmem:[%s6 + $0x8] sm:$0xff]
  %v1378 = vld [vmem:[#allocation4] sm:$0xff]
  %v1379 = vld [vmem:[#allocation4 + $0x8] sm:$0xff]
  %v1380 = vld [vmem:[#allocation4 + $0x10] sm:$0xff]
  %v1381 = vld [vmem:[#allocation4 + $0x18] sm:$0xff]
  %v1382 = vld [vmem:[#allocation4 + $0x20] sm:$0xff]
  %v1383 = vld [vmem:[#allocation4 + $0x28] sm:$0xff]
  %v1384 = vld [vmem:[#allocation4 + $0x30] sm:$0xff]
  %v1385 = vld [vmem:[#allocation4 + $0x38] sm:$0xff]
  %v1386 = vld [vmem:[#allocation4 + $0x40] sm:$0xff]
  %v1387 = vld [vmem:[#allocation4 + $0x48] sm:$0xff]
  %v1388 = vld [vmem:[#allocation4 + $0x50] sm:$0xff]
  %v1389 = vld [vmem:[#allocation4 + $0x58] sm:$0xff]
  %v1390 = vld [vmem:[#allocation4 + $0x60] sm:$0xff]
  %v1391 = vld [vmem:[#allocation4 + $0x68] sm:$0xff]
  %v1392 = vld [vmem:[#allocation4 + $0x70] sm:$0xff]
  %v1393 = vld [vmem:[#allocation4 + $0x78] sm:$0xff]
  %v1394 = vld [vmem:[#allocation4 + $0x80] sm:$0xff]
  %v1395 = vld [vmem:[#allocation4 + $0x88] sm:$0xff]
  %v1396 = vld [vmem:[#allocation4 + $0x90] sm:$0xff]
  %v1397 = vld [vmem:[#allocation4 + $0x98] sm:$0xff]
  %v1398 = vld [vmem:[#allocation4 + $0xa0] sm:$0xff]
  %v1399 = vld [vmem:[#allocation4 + $0xa8] sm:$0xff]
  %v1400 = vld [vmem:[#allocation4 + $0xb0] sm:$0xff]
  %v1401 = vld [vmem:[#allocation4 + $0xb8] sm:$0xff]
  %v1402 = vld [vmem:[#allocation4 + $0xc0] sm:$0xff]
  %v1403 = vld [vmem:[#allocation4 + $0xc8] sm:$0xff]
  %v1404 = vld [vmem:[#allocation4 + $0xd0] sm:$0xff]
  %v1405 = vld [vmem:[#allocation4 + $0xd8] sm:$0xff]
  %v1406 = vld [vmem:[#allocation4 + $0xe0] sm:$0xff]
  %v1407 = vld [vmem:[#allocation4 + $0xe8] sm:$0xff]
  %v1408 = vld [vmem:[#allocation4 + $0xf0] sm:$0xff]
  %v1409 = vld [vmem:[#allocation4 + $0xf8] sm:$0xff]
  %v1410 = vld [vmem:[#allocation4 + $0x100] sm:$0xff]
  %v1411 = vld [vmem:[#allocation4 + $0x108] sm:$0xff]
  %v1412 = vld [vmem:[#allocation4 + $0x110] sm:$0xff]
  %v1413 = vld [vmem:[#allocation4 + $0x118] sm:$0xff]
  %v1416 = vunpack.c.l.b16 %v1376
  %v1417 = vunpack.c.h.b16 %v1376
  %v1418 = vunpack.c.l.b16 %v1377
  %v1419 = vunpack.c.h.b16 %v1377
  %v1420 = vpack.c.b16 %v1418, %v1416
  %v1421 = vpack.c.b16 %v1419, %v1417
  %v1424 = vsel %vm196, %v1421, 0
  %1426 = vmatprep.subr.bf16.mxu0 %v1379
  %1427 = vmatpush1.bf16.msra.mxu0 %v1378
  %1428 = vmatprep.subr.bf16.mxu0 %v1383
  %1429 = vmatpush1.bf16.msra.mxu0 %v1382
  %1430 = vmatprep.subr.bf16.mxu0 %v1387
  %1431 = vmatpush1.bf16.msra.mxu0 %v1386
  %1432 = vmatprep.subr.bf16.mxu0 %v1391
  %1433 = vmatpush1.bf16.msra.mxu0 %v1390
  %1434 = vmatprep.subr.bf16.mxu0 %v1395
  %1435 = vmatpush1.bf16.msra.mxu0 %v1394
  %1436 = vmatprep.subr.bf16.mxu0 %v1399
  %1437 = vmatpush1.bf16.msra.mxu0 %v1398
  %1438 = vmatprep.subr.bf16.mxu0 %v1403
  %1439 = vmatpush1.bf16.msra.mxu0 %v1402
  %1440 = vmatprep.subr.bf16.mxu0 %v1407
  %1441 = vmatpush1.bf16.msra.mxu0 %v1406
  %1442 = vmatprep.subr.bf16.mxu0 %v1411
  %1443 = vmatpush1.bf16.msra.mxu0 %v1410
  %1444 = vmatprep.subr.bf16.mxu0 0
  %1445 = vmatpush1.bf16.msra.mxu0 0
  %1446 = vmatprep.subr.bf16.mxu0 0
  %1447 = vmatpush1.bf16.msra.mxu0 0
  %1448 = vmatprep.subr.bf16.mxu0 0
  %1449 = vmatpush1.bf16.msra.mxu0 0
  %1450 = vmatprep.subr.bf16.mxu0 0
  %1451 = vmatpush1.bf16.msra.mxu0 0
  %1452 = vmatprep.subr.bf16.mxu0 0
  %1453 = vmatpush1.bf16.msra.mxu0 0
  %1454 = vmatprep.subr.bf16.mxu0 0
  %1455 = vmatpush1.bf16.msra.mxu0 0
  %1456 = vmatprep.subr.bf16.mxu0 0
  %1457 = vmatpush1.bf16.msra.mxu0 0
  %1458 = vmatprep.mubr.bf16.mxu0 %v1424
  %1459 = vmatmul.mubr.bf16.gmra.mrb[0].mxu0 %v1420
  %v1460 = vpop.f32.mrb[0].mxu0
  %v1461 = vadd.f32 0.0, %v1460
  %v1462 = vpop.f32.mrb[0].mxu0
  %v1463 = vadd.f32 0.0, %v1462
  %v1464 = vpop.f32.mrb[0].mxu0
  %v1465 = vadd.f32 0.0, %v1464
  %v1466 = vpop.f32.mrb[0].mxu0
  %v1467 = vadd.f32 0.0, %v1466
  %1468 = vdwg.mxu0
  %1469 = vmatprep.subr.bf16.mxu0 %v1381
  %1470 = vmatpush1.bf16.msra.mxu0 %v1380
  %1471 = vmatprep.subr.bf16.mxu0 %v1385
  %1472 = vmatpush1.bf16.msra.mxu0 %v1384
  %1473 = vmatprep.subr.bf16.mxu0 %v1389
  %1474 = vmatpush1.bf16.msra.mxu0 %v1388
  %1475 = vmatprep.subr.bf16.mxu0 %v1393
  %1476 = vmatpush1.bf16.msra.mxu0 %v1392
  %1477 = vmatprep.subr.bf16.mxu0 %v1397
  %1478 = vmatpush1.bf16.msra.mxu0 %v1396
  %1479 = vmatprep.subr.bf16.mxu0 %v1401
  %1480 = vmatpush1.bf16.msra.mxu0 %v1400
  %1481 = vmatprep.subr.bf16.mxu0 %v1405
  %1482 = vmatpush1.bf16.msra.mxu0 %v1404
  %1483 = vmatprep.subr.bf16.mxu0 %v1409
  %1484 = vmatpush1.bf16.msra.mxu0 %v1408
  %1485 = vmatprep.subr.bf16.mxu0 %v1413
  %1486 = vmatpush1.bf16.msra.mxu0 %v1412
  %1487 = vmatprep.subr.bf16.mxu0 0
  %1488 = vmatpush1.bf16.msra.mxu0 0
  %1489 = vmatprep.subr.bf16.mxu0 0
  %1490 = vmatpush1.bf16.msra.mxu0 0
  %1491 = vmatprep.subr.bf16.mxu0 0
  %1492 = vmatpush1.bf16.msra.mxu0 0
  %1493 = vmatprep.subr.bf16.mxu0 0
  %1494 = vmatpush1.bf16.msra.mxu0 0
  %1495 = vmatprep.subr.bf16.mxu0 0
  %1496 = vmatpush1.bf16.msra.mxu0 0
  %1497 = vmatprep.subr.bf16.mxu0 0
  %1498 = vmatpush1.bf16.msra.mxu0 0
  %1499 = vmatprep.subr.bf16.mxu0 0
  %1500 = vmatpush1.bf16.msra.mxu0 0
  %1501 = vmatprep.mubr.bf16.mxu0 %v1424
  %1502 = vmatmul.mubr.bf16.gmra.mrb[0].mxu0 %v1420
  %v1503 = vpop.f32.mrb[0].mxu0
  %v1504 = vadd.f32 0.0, %v1503
  %v1505 = vpop.f32.mrb[0].mxu0
  %v1506 = vadd.f32 0.0, %v1505
  %v1507 = vpop.f32.mrb[0].mxu0
  %v1508 = vadd.f32 0.0, %v1507
  %v1509 = vpop.f32.mrb[0].mxu0
  %v1510 = vadd.f32 0.0, %v1509
  %1511 = vdwg.mxu0
  %v1512 = vld [vmem:[%s7] sm:$0xff]
  %v1513 = vld [vmem:[%s7 + $0x8] sm:$0xff]
  %v1514 = vld [vmem:[%s8] sm:$0xff]
  %v1515 = vld [vmem:[%s8 + $0x8] sm:$0xff]
  %v1516 = vadd.f32 %v1461, %v1463
  %v1517 = vadd.f32 %v1516, %v1504
  %v1518 = vadd.f32 %v1517, %v1506
  %1519 = vadd.xlane.f32.xlu0 %v1518
  %v1520 = vpop.xlane.xlu0 %1519
  %v1521 = vadd.f32 %v1465, %v1467
  %v1522 = vadd.f32 %v1521, %v1508
  %v1523 = vadd.f32 %v1522, %v1510
  %1524 = vadd.xlane.f32.xlu0 %v1523
  %v1525 = vpop.xlane.xlu0 %1524
  %v1526 = vmul.f32 %v1520, %v833
  %v1527 = vmul.f32 %v1525, %v833
  %v1528 = vsub.f32 %v1461, %v1526
  %v1529 = vsub.f32 %v1463, %v1526
  %v1530 = vsub.f32 %v1504, %v1526
  %v1531 = vsub.f32 %v1506, %v1526
  %v1532 = vsub.f32 %v1465, %v1527
  %v1533 = vsub.f32 %v1467, %v1527
  %v1534 = vsub.f32 %v1508, %v1527
  %v1535 = vsub.f32 %v1510, %v1527
  %v1536 = vmul.f32 %v1528, %v1528
  %v1537 = vmul.f32 %v1529, %v1529
  %v1538 = vmul.f32 %v1530, %v1530
  %v1539 = vmul.f32 %v1531, %v1531
  %v1540 = vmul.f32 %v1532, %v1532
  %v1541 = vmul.f32 %v1533, %v1533
  %v1542 = vmul.f32 %v1534, %v1534
  %v1543 = vmul.f32 %v1535, %v1535
  %v1544 = vadd.f32 %v1536, %v1537
  %v1545 = vadd.f32 %v1544, %v1538
  %v1546 = vadd.f32 %v1545, %v1539
  %1547 = vadd.xlane.f32.xlu0 %v1546
  %v1548 = vpop.xlane.xlu0 %1547
  %v1549 = vadd.f32 %v1540, %v1541
  %v1550 = vadd.f32 %v1549, %v1542
  %v1551 = vadd.f32 %v1550, %v1543
  %1552 = vadd.xlane.f32.xlu0 %v1551
  %v1553 = vpop.xlane.xlu0 %1552
  %v1554 = vmul.f32 %v1548, %v833
  %v1555 = vmul.f32 %v1553, %v833
  %v1556 = vadd.f32 %v1554, 1e-05
  %v1557 = vadd.f32 %v1555, 1e-05
  %v1558 = vrsqrt.pop %v1556
  %v1559 = vrsqrt.pop %v1557
  %v1560 = vmul.f32 %v1528, %v1558
  %v1561 = vmul.f32 %v1529, %v1558
  %v1562 = vmul.f32 %v1530, %v1558
  %v1563 = vmul.f32 %v1531, %v1558
  %v1564 = vmul.f32 %v1532, %v1559
  %v1565 = vmul.f32 %v1533, %v1559
  %v1566 = vmul.f32 %v1534, %v1559
  %v1567 = vmul.f32 %v1535, %v1559
  %1569 = vset.pattern.permute.xlu0 0
  %1570 = vperm.xlu0 %1569, %v1512
  %v1571 = vpop.permute.xlu0 %1570
  %1574 = vset.pattern.permute.xlu0 0
  %1575 = vperm.xlu0 %1574, %v1513
  %v1576 = vpop.permute.xlu0 %1575
  %v1578 = vmul.f32 %v1560, %v1571
  %v1579 = vmul.f32 %v1561, %v1571
  %v1580 = vmul.f32 %v1562, %v1571
  %v1581 = vmul.f32 %v1563, %v1571
  %v1582 = vmul.f32 %v1564, %v1576
  %v1583 = vmul.f32 %v1565, %v1576
  %v1584 = vmul.f32 %v1566, %v1576
  %v1585 = vmul.f32 %v1567, %v1576
  %1587 = vset.pattern.permute.xlu0 0
  %1588 = vperm.xlu0 %1587, %v1514
  %v1589 = vpop.permute.xlu0 %1588
  %1592 = vset.pattern.permute.xlu0 0
  %1593 = vperm.xlu0 %1592, %v1515
  %v1594 = vpop.permute.xlu0 %1593
  %v1596 = vadd.f32 %v1578, %v1589
  %v1597 = vadd.f32 %v1579, %v1589
  %v1598 = vadd.f32 %v1580, %v1589
  %v1599 = vadd.f32 %v1581, %v1589
  %v1600 = vadd.f32 %v1582, %v1594
  %v1601 = vadd.f32 %v1583, %v1594
  %v1602 = vadd.f32 %v1584, %v1594
  %v1603 = vadd.f32 %v1585, %v1594
  %v1604 = vadd.f32 %v1596, %v43
  %v1605 = vadd.f32 %v1597, %v44
  %v1606 = vadd.f32 %v1598, %v45
  %v1607 = vadd.f32 %v1599, %v46
  %v1608 = vadd.f32 %v1600, %v47
  %v1609 = vadd.f32 %v1601, %v48
  %v1610 = vadd.f32 %v1602, %v49
  %v1611 = vadd.f32 %v1603, %v50
  %v1612 = vmax.f32 %v1604, 0.0
  %v1613 = vmax.f32 %v1605, 0.0
  %v1614 = vmax.f32 %v1606, 0.0
  %v1615 = vmax.f32 %v1607, 0.0
  %v1616 = vmax.f32 %v1608, 0.0
  %v1617 = vmax.f32 %v1609, 0.0
  %v1618 = vmax.f32 %v1610, 0.0
  %v1619 = vmax.f32 %v1611, 0.0
  %1620 = vst [vmem:[%s9] sm:$0xff] %v1612
  %1621 = vst [vmem:[%s9 + $0x8] sm:$0xff] %v1613
  %1622 = vst [vmem:[%s9 + $0x10] sm:$0xff] %v1614
  %1623 = vst [vmem:[%s9 + $0x18] sm:$0xff] %v1615
  %1624 = vst [vmem:[%s9 + $0x20] sm:$0xff] %v1616
  %1625 = vst [vmem:[%s9 + $0x28] sm:$0xff] %v1617
  %1626 = vst [vmem:[%s9 + $0x30] sm:$0xff] %v1618
  %1627 = vst [vmem:[%s9 + $0x38] sm:$0xff] %v1619
  // Predicated region
  $region38: #{residual_block_forward.1} parent=0 // pred_check
    _
  $region39: #{residual_block_forward.1} parent=0 // pred_check_branch
    %1629 = sbr.rel (0) target = $region41
  $region40: #{residual_block_forward.1} parent=0 // pred_region
    _
  $region41: #{residual_block_forward.1} parent=0 // pred_fallthru
    _
  // Predicated region
  $region42: #{residual_block_forward.1} parent=0 // pred_check
    _
  $region43: #{residual_block_forward.1} parent=0 // pred_check_branch
    %1631 = sbr.rel (0) target = $region45
  $region44: #{residual_block_forward.1} parent=0 // pred_region
    _
  $region45: #{residual_block_forward.1} parent=0 // pred_fallthru
    _

</llo_original>
